<compile_context>
chip_gen: v7x
topology: tpu7x:2x2x1
jax: 0.10.0
libtpu: 0.0.40
codegen_flags: <defaults>
</compile_context>

<pallas_src>
import functools

import jax
import jax.numpy as jnp
from jax import lax
from jax.experimental import pallas as pl
from jax.experimental.pallas import tpu as pltpu


_STRIDES = (2, 1, 2, 1, 2)   # conv0..conv4 strides
_HALO = 4                    # max cumulative dilation of any layer


def _fused_toy_kernel(res, w_ref, x_ref, out_ref, buf_a, buf_b):
    """All 5 convs for one batch element, VMEM-resident.

    w_ref  : (45,) f32 in SMEM  — 5 layers x 3 x 3, row-major.
    x_ref  : (1, res, res) f32 VMEM — input image.
    out_ref: (1, res, res) f32 VMEM — dilated output grid; real conv outputs
             live at positions (8*i, 8*j).
    buf_a, buf_b: (res+2*HALO, res+2*HALO) f32 VMEM scratch, ping-ponged
             across layers; the halo region stays zero (= conv padding).
    """
    A = _HALO

    # In-kernel zero padding: zero both buffers once, then drop the image
    # into the live window of buf_a.  The halo is never written again, so it
    # keeps supplying the zero padding for every layer.
    buf_a[...] = jnp.zeros_like(buf_a)
    buf_b[...] = jnp.zeros_like(buf_b)
    buf_a[pl.ds(A, res), pl.ds(A, res)] = x_ref[0]

    src, dst = buf_a, buf_b
    dil = 1                                   # cumulative input stride
    last = len(_STRIDES) - 1
    for l, s in enumerate(_STRIDES):
        # 3x3 conv with dilation `dil`, evaluated on the full res x res grid.
        # Live samples of this layer's input sit every `dil` positions; live
        # outputs end up every `dil * s` positions.  All 9 taps are plain
        # shifted window reads from VMEM at static offsets.
        acc = jnp.zeros((res, res), jnp.float32)
        for di in range(3):
            for dj in range(3):
                coef = w_ref[l * 9 + di * 3 + dj]
                acc = acc + coef * src[pl.ds(A + dil * (di - 1), res),
                                       pl.ds(A + dil * (dj - 1), res)]
        if l == last:
            out_ref[0] = acc.astype(out_ref.dtype)
        else:
            dst[pl.ds(A, res), pl.ds(A, res)] = acc
            src, dst = dst, src
        dil *= s


def toy_forward(x_nchw, weights):
    """Pallas implementation of Toy.forward.  x_nchw: (B, 1, res, res)."""
    B, C, H, W = x_nchw.shape
    assert C == 1, "Conv2d(1, 1, ...) layers need a single input channel"
    assert H == W and H % 8 == 0, "spatial size must be a multiple of 8"
    res = H
    total_stride = 1
    for s in _STRIDES:
        total_stride *= s            # == 8

    x = x_nchw[:, 0, :, :].astype(jnp.float32)
    w_flat = jnp.stack(weights).astype(jnp.float32).reshape(-1)   # (45,)

    pad = res + 2 * _HALO
    y = pl.pallas_call(
        functools.partial(_fused_toy_kernel, res),
        out_shape=jax.ShapeDtypeStruct((B, res, res), jnp.float32),
        grid=(B,),
        in_specs=[
            pl.BlockSpec(memory_space=pltpu.MemorySpace.SMEM),    # weights
            pl.BlockSpec((1, res, res), lambda b: (b, 0, 0)),     # image
        ],
        out_specs=pl.BlockSpec((1, res, res), lambda b: (b, 0, 0)),
        scratch_shapes=[
            pltpu.VMEM((pad, pad), jnp.float32),
            pltpu.VMEM((pad, pad), jnp.float32),
        ],
        compiler_params=pltpu.CompilerParams(
            dimension_semantics=("parallel",)),
    )(w_flat, x)

    # Live outputs sit every `total_stride` positions of the dilated grid.
    out = y[:, ::total_stride, ::total_stride]
    return out[:, None, :, :]


def toy_forward_ref(x, weights):
    """Pure-JAX reference (lax conv) for correctness check."""
    for w, s in zip(weights, _STRIDES):
        x = lax.conv_general_dilated(
            x, w.reshape(1, 1, 3, 3),
            window_strides=(s, s), padding=((1, 1), (1, 1)),
            dimension_numbers=("NCHW", "OIHW", "NCHW"))
    return x


if __name__ == "__main__":
    key = jax.random.PRNGKey(0)
    kx, *kws = jax.random.split(key, 6)

    # Conv2d(1, 1, ...) layers require a single input channel, so C = 1.
    B, C, res = 2, 1, 64
    x = jax.random.normal(kx, (B, C, res, res), dtype=jnp.float32)

    # Deterministic (3,3) weights per layer, ~1/sqrt(fan_in) scale.
    weights = [jax.random.normal(k, (3, 3), dtype=jnp.float32) / 3.0
               for k in kws]

    out = jax.block_until_ready(toy_forward(x, weights))

    # 64 -s2-> 32 -> 32 -s2-> 16 -> 16 -s2-> 8
    assert out.shape == (B, 1, 8, 8), out.shape
    ref = toy_forward_ref(x, weights)
    assert jnp.allclose(out, ref, atol=1e-4, rtol=1e-4), "mismatch vs reference"

    print("KERNEL_OK")
</pallas_src>

<mosaic_0001>
module attributes {stable_mosaic.version = 11 : i64} {
  func.func @_fused_toy_kernel(%arg0: i32, %arg1: memref<45xf32, #tpu.memory_space<smem>>, %arg2: memref<1x64x64xf32, #tpu.memory_space<vmem>>, %arg3: memref<1x64x64xf32, #tpu.memory_space<vmem>>, %arg4: memref<72x72xf32, #tpu.memory_space<vmem>>, %arg5: memref<72x72xf32, #tpu.memory_space<vmem>>) attributes {dimension_semantics = [#tpu.dimension_semantics<parallel>], iteration_bounds = array<i64: 2>, scalar_prefetch = 0 : i64, scratch_operands = 2 : i64, tpu.core_type = #tpu.core_type<tc>, window_params = [{transform_indices = @transform_0, window_bounds = array<i64: 45>}, {transform_indices = @transform_1, window_bounds = array<i64: 1, 64, 64>}, {transform_indices = @transform_2, window_bounds = array<i64: 1, 64, 64>}]} {
    %cst = arith.constant 0.000000e+00 : f32
    %0 = vector.broadcast %cst : f32 to vector<72x72xf32>
    %c0 = arith.constant 0 : index
    %c0_0 = arith.constant 0 : index
    %1 = vector.load %arg4[%c0, %c0_0] : memref<72x72xf32, #tpu.memory_space<vmem>>, vector<72x72xf32>
    tpu.vector_store %arg4[%c0, %c0_0], %0 {strides = array<i32>} : memref<72x72xf32, #tpu.memory_space<vmem>>, vector<72x72xf32>,
    %cst_1 = arith.constant 0.000000e+00 : f32
    %2 = vector.broadcast %cst_1 : f32 to vector<72x72xf32>
    %c0_2 = arith.constant 0 : index
    %c0_3 = arith.constant 0 : index
    %3 = vector.load %arg5[%c0_2, %c0_3] : memref<72x72xf32, #tpu.memory_space<vmem>>, vector<72x72xf32>
    tpu.vector_store %arg5[%c0_2, %c0_3], %2 {strides = array<i32>} : memref<72x72xf32, #tpu.memory_space<vmem>>, vector<72x72xf32>,
    %c0_4 = arith.constant 0 : index
    %c0_5 = arith.constant 0 : index
    %c0_6 = arith.constant 0 : index
    %4 = vector.load %arg2[%c0_4, %c0_5, %c0_6] : memref<1x64x64xf32, #tpu.memory_space<vmem>>, vector<1x64x64xf32>
    %5 = vector.shape_cast %4 : vector<1x64x64xf32> to vector<64x64xf32>
    %c4 = arith.constant 4 : index
    %c4_7 = arith.constant 4 : index
    %6 = vector.load %arg4[%c4, %c4_7] : memref<72x72xf32, #tpu.memory_space<vmem>>, vector<64x64xf32>
    tpu.vector_store %arg4[%c4, %c4_7], %5 {strides = array<i32>} : memref<72x72xf32, #tpu.memory_space<vmem>>, vector<64x64xf32>,
    %cst_8 = arith.constant 0.000000e+00 : f32
    %7 = vector.broadcast %cst_8 : f32 to vector<64x64xf32>
    %c0_9 = arith.constant 0 : index
    %8 = memref.load %arg1[%c0_9] : memref<45xf32, #tpu.memory_space<smem>>
    %c3 = arith.constant 3 : index
    %c3_10 = arith.constant 3 : index
    %9 = vector.load %arg4[%c3, %c3_10] : memref<72x72xf32, #tpu.memory_space<vmem>>, vector<64x64xf32>
    %10 = vector.broadcast %8 : f32 to vector<64x64xf32>
    %11 = arith.mulf %10, %9 : vector<64x64xf32>
    %12 = arith.addf %7, %11 : vector<64x64xf32>
    %c1 = arith.constant 1 : index
    %13 = memref.load %arg1[%c1] : memref<45xf32, #tpu.memory_space<smem>>
    %c3_11 = arith.constant 3 : index
    %c4_12 = arith.constant 4 : index
    %14 = vector.load %arg4[%c3_11, %c4_12] : memref<72x72xf32, #tpu.memory_space<vmem>>, vector<64x64xf32>
    %15 = vector.broadcast %13 : f32 to vector<64x64xf32>
    %16 = arith.mulf %15, %14 : vector<64x64xf32>
    %17 = arith.addf %12, %16 : vector<64x64xf32>
    %c2 = arith.constant 2 : index
    %18 = memref.load %arg1[%c2] : memref<45xf32, #tpu.memory_space<smem>>
    %c3_13 = arith.constant 3 : index
    %c5 = arith.constant 5 : index
    %19 = vector.load %arg4[%c3_13, %c5] : memref<72x72xf32, #tpu.memory_space<vmem>>, vector<64x64xf32>
    %20 = vector.broadcast %18 : f32 to vector<64x64xf32>
    %21 = arith.mulf %20, %19 : vector<64x64xf32>
    %22 = arith.addf %17, %21 : vector<64x64xf32>
    %c3_14 = arith.constant 3 : index
    %23 = memref.load %arg1[%c3_14] : memref<45xf32, #tpu.memory_space<smem>>
    %c4_15 = arith.constant 4 : index
    %c3_16 = arith.constant 3 : index
    %24 = vector.load %arg4[%c4_15, %c3_16] : memref<72x72xf32, #tpu.memory_space<vmem>>, vector<64x64xf32>
    %25 = vector.broadcast %23 : f32 to vector<64x64xf32>
    %26 = arith.mulf %25, %24 : vector<64x64xf32>
    %27 = arith.addf %22, %26 : vector<64x64xf32>
    %c4_17 = arith.constant 4 : index
    %28 = memref.load %arg1[%c4_17] : memref<45xf32, #tpu.memory_space<smem>>
    %c4_18 = arith.constant 4 : index
    %c4_19 = arith.constant 4 : index
    %29 = vector.load %arg4[%c4_18, %c4_19] : memref<72x72xf32, #tpu.memory_space<vmem>>, vector<64x64xf32>
    %30 = vector.broadcast %28 : f32 to vector<64x64xf32>
    %31 = arith.mulf %30, %29 : vector<64x64xf32>
    %32 = arith.addf %27, %31 : vector<64x64xf32>
    %c5_20 = arith.constant 5 : index
    %33 = memref.load %arg1[%c5_20] : memref<45xf32, #tpu.memory_space<smem>>
    %c4_21 = arith.constant 4 : index
    %c5_22 = arith.constant 5 : index
    %34 = vector.load %arg4[%c4_21, %c5_22] : memref<72x72xf32, #tpu.memory_space<vmem>>, vector<64x64xf32>
    %35 = vector.broadcast %33 : f32 to vector<64x64xf32>
    %36 = arith.mulf %35, %34 : vector<64x64xf32>
    %37 = arith.addf %32, %36 : vector<64x64xf32>
    %c6 = arith.constant 6 : index
    %38 = memref.load %arg1[%c6] : memref<45xf32, #tpu.memory_space<smem>>
    %c5_23 = arith.constant 5 : index
    %c3_24 = arith.constant 3 : index
    %39 = vector.load %arg4[%c5_23, %c3_24] : memref<72x72xf32, #tpu.memory_space<vmem>>, vector<64x64xf32>
    %40 = vector.broadcast %38 : f32 to vector<64x64xf32>
    %41 = arith.mulf %40, %39 : vector<64x64xf32>
    %42 = arith.addf %37, %41 : vector<64x64xf32>
    %c7 = arith.constant 7 : index
    %43 = memref.load %arg1[%c7] : memref<45xf32, #tpu.memory_space<smem>>
    %c5_25 = arith.constant 5 : index
    %c4_26 = arith.constant 4 : index
    %44 = vector.load %arg4[%c5_25, %c4_26] : memref<72x72xf32, #tpu.memory_space<vmem>>, vector<64x64xf32>
    %45 = vector.broadcast %43 : f32 to vector<64x64xf32>
    %46 = arith.mulf %45, %44 : vector<64x64xf32>
    %47 = arith.addf %42, %46 : vector<64x64xf32>
    %c8 = arith.constant 8 : index
    %48 = memref.load %arg1[%c8] : memref<45xf32, #tpu.memory_space<smem>>
    %c5_27 = arith.constant 5 : index
    %c5_28 = arith.constant 5 : index
    %49 = vector.load %arg4[%c5_27, %c5_28] : memref<72x72xf32, #tpu.memory_space<vmem>>, vector<64x64xf32>
    %50 = vector.broadcast %48 : f32 to vector<64x64xf32>
    %51 = arith.mulf %50, %49 : vector<64x64xf32>
    %52 = arith.addf %47, %51 : vector<64x64xf32>
    %c4_29 = arith.constant 4 : index
    %c4_30 = arith.constant 4 : index
    %53 = vector.load %arg5[%c4_29, %c4_30] : memref<72x72xf32, #tpu.memory_space<vmem>>, vector<64x64xf32>
    tpu.vector_store %arg5[%c4_29, %c4_30], %52 {strides = array<i32>} : memref<72x72xf32, #tpu.memory_space<vmem>>, vector<64x64xf32>,
    %cst_31 = arith.constant 0.000000e+00 : f32
    %54 = vector.broadcast %cst_31 : f32 to vector<64x64xf32>
    %c9 = arith.constant 9 : index
    %55 = memref.load %arg1[%c9] : memref<45xf32, #tpu.memory_space<smem>>
    %c2_32 = arith.constant 2 : index
    %c2_33 = arith.constant 2 : index
    %56 = vector.load %arg5[%c2_32, %c2_33] : memref<72x72xf32, #tpu.memory_space<vmem>>, vector<64x64xf32>
    %57 = vector.broadcast %55 : f32 to vector<64x64xf32>
    %58 = arith.mulf %57, %56 : vector<64x64xf32>
    %59 = arith.addf %54, %58 : vector<64x64xf32>
    %c10 = arith.constant 10 : index
    %60 = memref.load %arg1[%c10] : memref<45xf32, #tpu.memory_space<smem>>
    %c2_34 = arith.constant 2 : index
    %c4_35 = arith.constant 4 : index
    %61 = vector.load %arg5[%c2_34, %c4_35] : memref<72x72xf32, #tpu.memory_space<vmem>>, vector<64x64xf32>
    %62 = vector.broadcast %60 : f32 to vector<64x64xf32>
    %63 = arith.mulf %62, %61 : vector<64x64xf32>
    %64 = arith.addf %59, %63 : vector<64x64xf32>
    %c11 = arith.constant 11 : index
    %65 = memref.load %arg1[%c11] : memref<45xf32, #tpu.memory_space<smem>>
    %c2_36 = arith.constant 2 : index
    %c6_37 = arith.constant 6 : index
    %66 = vector.load %arg5[%c2_36, %c6_37] : memref<72x72xf32, #tpu.memory_space<vmem>>, vector<64x64xf32>
    %67 = vector.broadcast %65 : f32 to vector<64x64xf32>
    %68 = arith.mulf %67, %66 : vector<64x64xf32>
    %69 = arith.addf %64, %68 : vector<64x64xf32>
    %c12 = arith.constant 12 : index
    %70 = memref.load %arg1[%c12] : memref<45xf32, #tpu.memory_space<smem>>
    %c4_38 = arith.constant 4 : index
    %c2_39 = arith.constant 2 : index
    %71 = vector.load %arg5[%c4_38, %c2_39] : memref<72x72xf32, #tpu.memory_space<vmem>>, vector<64x64xf32>
    %72 = vector.broadcast %70 : f32 to vector<64x64xf32>
    %73 = arith.mulf %72, %71 : vector<64x64xf32>
    %74 = arith.addf %69, %73 : vector<64x64xf32>
    %c13 = arith.constant 13 : index
    %75 = memref.load %arg1[%c13] : memref<45xf32, #tpu.memory_space<smem>>
    %c4_40 = arith.constant 4 : index
    %c4_41 = arith.constant 4 : index
    %76 = vector.load %arg5[%c4_40, %c4_41] : memref<72x72xf32, #tpu.memory_space<vmem>>, vector<64x64xf32>
    %77 = vector.broadcast %75 : f32 to vector<64x64xf32>
    %78 = arith.mulf %77, %76 : vector<64x64xf32>
    %79 = arith.addf %74, %78 : vector<64x64xf32>
    %c14 = arith.constant 14 : index
    %80 = memref.load %arg1[%c14] : memref<45xf32, #tpu.memory_space<smem>>
    %c4_42 = arith.constant 4 : index
    %c6_43 = arith.constant 6 : index
    %81 = vector.load %arg5[%c4_42, %c6_43] : memref<72x72xf32, #tpu.memory_space<vmem>>, vector<64x64xf32>
    %82 = vector.broadcast %80 : f32 to vector<64x64xf32>
    %83 = arith.mulf %82, %81 : vector<64x64xf32>
    %84 = arith.addf %79, %83 : vector<64x64xf32>
    %c15 = arith.constant 15 : index
    %85 = memref.load %arg1[%c15] : memref<45xf32, #tpu.memory_space<smem>>
    %c6_44 = arith.constant 6 : index
    %c2_45 = arith.constant 2 : index
    %86 = vector.load %arg5[%c6_44, %c2_45] : memref<72x72xf32, #tpu.memory_space<vmem>>, vector<64x64xf32>
    %87 = vector.broadcast %85 : f32 to vector<64x64xf32>
    %88 = arith.mulf %87, %86 : vector<64x64xf32>
    %89 = arith.addf %84, %88 : vector<64x64xf32>
    %c16 = arith.constant 16 : index
    %90 = memref.load %arg1[%c16] : memref<45xf32, #tpu.memory_space<smem>>
    %c6_46 = arith.constant 6 : index
    %c4_47 = arith.constant 4 : index
    %91 = vector.load %arg5[%c6_46, %c4_47] : memref<72x72xf32, #tpu.memory_space<vmem>>, vector<64x64xf32>
    %92 = vector.broadcast %90 : f32 to vector<64x64xf32>
    %93 = arith.mulf %92, %91 : vector<64x64xf32>
    %94 = arith.addf %89, %93 : vector<64x64xf32>
    %c17 = arith.constant 17 : index
    %95 = memref.load %arg1[%c17] : memref<45xf32, #tpu.memory_space<smem>>
    %c6_48 = arith.constant 6 : index
    %c6_49 = arith.constant 6 : index
    %96 = vector.load %arg5[%c6_48, %c6_49] : memref<72x72xf32, #tpu.memory_space<vmem>>, vector<64x64xf32>
    %97 = vector.broadcast %95 : f32 to vector<64x64xf32>
    %98 = arith.mulf %97, %96 : vector<64x64xf32>
    %99 = arith.addf %94, %98 : vector<64x64xf32>
    %c4_50 = arith.constant 4 : index
    %c4_51 = arith.constant 4 : index
    %100 = vector.load %arg4[%c4_50, %c4_51] : memref<72x72xf32, #tpu.memory_space<vmem>>, vector<64x64xf32>
    tpu.vector_store %arg4[%c4_50, %c4_51], %99 {strides = array<i32>} : memref<72x72xf32, #tpu.memory_space<vmem>>, vector<64x64xf32>,
    %cst_52 = arith.constant 0.000000e+00 : f32
    %101 = vector.broadcast %cst_52 : f32 to vector<64x64xf32>
    %c18 = arith.constant 18 : index
    %102 = memref.load %arg1[%c18] : memref<45xf32, #tpu.memory_space<smem>>
    %c2_53 = arith.constant 2 : index
    %c2_54 = arith.constant 2 : index
    %103 = vector.load %arg4[%c2_53, %c2_54] : memref<72x72xf32, #tpu.memory_space<vmem>>, vector<64x64xf32>
    %104 = vector.broadcast %102 : f32 to vector<64x64xf32>
    %105 = arith.mulf %104, %103 : vector<64x64xf32>
    %106 = arith.addf %101, %105 : vector<64x64xf32>
    %c19 = arith.constant 19 : index
    %107 = memref.load %arg1[%c19] : memref<45xf32, #tpu.memory_space<smem>>
    %c2_55 = arith.constant 2 : index
    %c4_56 = arith.constant 4 : index
    %108 = vector.load %arg4[%c2_55, %c4_56] : memref<72x72xf32, #tpu.memory_space<vmem>>, vector<64x64xf32>
    %109 = vector.broadcast %107 : f32 to vector<64x64xf32>
    %110 = arith.mulf %109, %108 : vector<64x64xf32>
    %111 = arith.addf %106, %110 : vector<64x64xf32>
    %c20 = arith.constant 20 : index
    %112 = memref.load %arg1[%c20] : memref<45xf32, #tpu.memory_space<smem>>
    %c2_57 = arith.constant 2 : index
    %c6_58 = arith.constant 6 : index
    %113 = vector.load %arg4[%c2_57, %c6_58] : memref<72x72xf32, #tpu.memory_space<vmem>>, vector<64x64xf32>
    %114 = vector.broadcast %112 : f32 to vector<64x64xf32>
    %115 = arith.mulf %114, %113 : vector<64x64xf32>
    %116 = arith.addf %111, %115 : vector<64x64xf32>
    %c21 = arith.constant 21 : index
    %117 = memref.load %arg1[%c21] : memref<45xf32, #tpu.memory_space<smem>>
    %c4_59 = arith.constant 4 : index
    %c2_60 = arith.constant 2 : index
    %118 = vector.load %arg4[%c4_59, %c2_60] : memref<72x72xf32, #tpu.memory_space<vmem>>, vector<64x64xf32>
    %119 = vector.broadcast %117 : f32 to vector<64x64xf32>
    %120 = arith.mulf %119, %118 : vector<64x64xf32>
    %121 = arith.addf %116, %120 : vector<64x64xf32>
    %c22 = arith.constant 22 : index
    %122 = memref.load %arg1[%c22] : memref<45xf32, #tpu.memory_space<smem>>
    %c4_61 = arith.constant 4 : index
    %c4_62 = arith.constant 4 : index
    %123 = vector.load %arg4[%c4_61, %c4_62] : memref<72x72xf32, #tpu.memory_space<vmem>>, vector<64x64xf32>
    %124 = vector.broadcast %122 : f32 to vector<64x64xf32>
    %125 = arith.mulf %124, %123 : vector<64x64xf32>
    %126 = arith.addf %121, %125 : vector<64x64xf32>
    %c23 = arith.constant 23 : index
    %127 = memref.load %arg1[%c23] : memref<45xf32, #tpu.memory_space<smem>>
    %c4_63 = arith.constant 4 : index
    %c6_64 = arith.constant 6 : index
    %128 = vector.load %arg4[%c4_63, %c6_64] : memref<72x72xf32, #tpu.memory_space<vmem>>, vector<64x64xf32>
    %129 = vector.broadcast %127 : f32 to vector<64x64xf32>
    %130 = arith.mulf %129, %128 : vector<64x64xf32>
    %131 = arith.addf %126, %130 : vector<64x64xf32>
    %c24 = arith.constant 24 : index
    %132 = memref.load %arg1[%c24] : memref<45xf32, #tpu.memory_space<smem>>
    %c6_65 = arith.constant 6 : index
    %c2_66 = arith.constant 2 : index
    %133 = vector.load %arg4[%c6_65, %c2_66] : memref<72x72xf32, #tpu.memory_space<vmem>>, vector<64x64xf32>
    %134 = vector.broadcast %132 : f32 to vector<64x64xf32>
    %135 = arith.mulf %134, %133 : vector<64x64xf32>
    %136 = arith.addf %131, %135 : vector<64x64xf32>
    %c25 = arith.constant 25 : index
    %137 = memref.load %arg1[%c25] : memref<45xf32, #tpu.memory_space<smem>>
    %c6_67 = arith.constant 6 : index
    %c4_68 = arith.constant 4 : index
    %138 = vector.load %arg4[%c6_67, %c4_68] : memref<72x72xf32, #tpu.memory_space<vmem>>, vector<64x64xf32>
    %139 = vector.broadcast %137 : f32 to vector<64x64xf32>
    %140 = arith.mulf %139, %138 : vector<64x64xf32>
    %141 = arith.addf %136, %140 : vector<64x64xf32>
    %c26 = arith.constant 26 : index
    %142 = memref.load %arg1[%c26] : memref<45xf32, #tpu.memory_space<smem>>
    %c6_69 = arith.constant 6 : index
    %c6_70 = arith.constant 6 : index
    %143 = vector.load %arg4[%c6_69, %c6_70] : memref<72x72xf32, #tpu.memory_space<vmem>>, vector<64x64xf32>
    %144 = vector.broadcast %142 : f32 to vector<64x64xf32>
    %145 = arith.mulf %144, %143 : vector<64x64xf32>
    %146 = arith.addf %141, %145 : vector<64x64xf32>
    %c4_71 = arith.constant 4 : index
    %c4_72 = arith.constant 4 : index
    %147 = vector.load %arg5[%c4_71, %c4_72] : memref<72x72xf32, #tpu.memory_space<vmem>>, vector<64x64xf32>
    tpu.vector_store %arg5[%c4_71, %c4_72], %146 {strides = array<i32>} : memref<72x72xf32, #tpu.memory_space<vmem>>, vector<64x64xf32>,
    %cst_73 = arith.constant 0.000000e+00 : f32
    %148 = vector.broadcast %cst_73 : f32 to vector<64x64xf32>
    %c27 = arith.constant 27 : index
    %149 = memref.load %arg1[%c27] : memref<45xf32, #tpu.memory_space<smem>>
    %c0_74 = arith.constant 0 : index
    %c0_75 = arith.constant 0 : index
    %150 = vector.load %arg5[%c0_74, %c0_75] : memref<72x72xf32, #tpu.memory_space<vmem>>, vector<64x64xf32>
    %151 = vector.broadcast %149 : f32 to vector<64x64xf32>
    %152 = arith.mulf %151, %150 : vector<64x64xf32>
    %153 = arith.addf %148, %152 : vector<64x64xf32>
    %c28 = arith.constant 28 : index
    %154 = memref.load %arg1[%c28] : memref<45xf32, #tpu.memory_space<smem>>
    %c0_76 = arith.constant 0 : index
    %c4_77 = arith.constant 4 : index
    %155 = vector.load %arg5[%c0_76, %c4_77] : memref<72x72xf32, #tpu.memory_space<vmem>>, vector<64x64xf32>
    %156 = vector.broadcast %154 : f32 to vector<64x64xf32>
    %157 = arith.mulf %156, %155 : vector<64x64xf32>
    %158 = arith.addf %153, %157 : vector<64x64xf32>
    %c29 = arith.constant 29 : index
    %159 = memref.load %arg1[%c29] : memref<45xf32, #tpu.memory_space<smem>>
    %c0_78 = arith.constant 0 : index
    %c8_79 = arith.constant 8 : index
    %160 = vector.load %arg5[%c0_78, %c8_79] : memref<72x72xf32, #tpu.memory_space<vmem>>, vector<64x64xf32>
    %161 = vector.broadcast %159 : f32 to vector<64x64xf32>
    %162 = arith.mulf %161, %160 : vector<64x64xf32>
    %163 = arith.addf %158, %162 : vector<64x64xf32>
    %c30 = arith.constant 30 : index
    %164 = memref.load %arg1[%c30] : memref<45xf32, #tpu.memory_space<smem>>
    %c4_80 = arith.constant 4 : index
    %c0_81 = arith.constant 0 : index
    %165 = vector.load %arg5[%c4_80, %c0_81] : memref<72x72xf32, #tpu.memory_space<vmem>>, vector<64x64xf32>
    %166 = vector.broadcast %164 : f32 to vector<64x64xf32>
    %167 = arith.mulf %166, %165 : vector<64x64xf32>
    %168 = arith.addf %163, %167 : vector<64x64xf32>
    %c31 = arith.constant 31 : index
    %169 = memref.load %arg1[%c31] : memref<45xf32, #tpu.memory_space<smem>>
    %c4_82 = arith.constant 4 : index
    %c4_83 = arith.constant 4 : index
    %170 = vector.load %arg5[%c4_82, %c4_83] : memref<72x72xf32, #tpu.memory_space<vmem>>, vector<64x64xf32>
    %171 = vector.broadcast %169 : f32 to vector<64x64xf32>
    %172 = arith.mulf %171, %170 : vector<64x64xf32>
    %173 = arith.addf %168, %172 : vector<64x64xf32>
    %c32 = arith.constant 32 : index
    %174 = memref.load %arg1[%c32] : memref<45xf32, #tpu.memory_space<smem>>
    %c4_84 = arith.constant 4 : index
    %c8_85 = arith.constant 8 : index
    %175 = vector.load %arg5[%c4_84, %c8_85] : memref<72x72xf32, #tpu.memory_space<vmem>>, vector<64x64xf32>
    %176 = vector.broadcast %174 : f32 to vector<64x64xf32>
    %177 = arith.mulf %176, %175 : vector<64x64xf32>
    %178 = arith.addf %173, %177 : vector<64x64xf32>
    %c33 = arith.constant 33 : index
    %179 = memref.load %arg1[%c33] : memref<45xf32, #tpu.memory_space<smem>>
    %c8_86 = arith.constant 8 : index
    %c0_87 = arith.constant 0 : index
    %180 = vector.load %arg5[%c8_86, %c0_87] : memref<72x72xf32, #tpu.memory_space<vmem>>, vector<64x64xf32>
    %181 = vector.broadcast %179 : f32 to vector<64x64xf32>
    %182 = arith.mulf %181, %180 : vector<64x64xf32>
    %183 = arith.addf %178, %182 : vector<64x64xf32>
    %c34 = arith.constant 34 : index
    %184 = memref.load %arg1[%c34] : memref<45xf32, #tpu.memory_space<smem>>
    %c8_88 = arith.constant 8 : index
    %c4_89 = arith.constant 4 : index
    %185 = vector.load %arg5[%c8_88, %c4_89] : memref<72x72xf32, #tpu.memory_space<vmem>>, vector<64x64xf32>
    %186 = vector.broadcast %184 : f32 to vector<64x64xf32>
    %187 = arith.mulf %186, %185 : vector<64x64xf32>
    %188 = arith.addf %183, %187 : vector<64x64xf32>
    %c35 = arith.constant 35 : index
    %189 = memref.load %arg1[%c35] : memref<45xf32, #tpu.memory_space<smem>>
    %c8_90 = arith.constant 8 : index
    %c8_91 = arith.constant 8 : index
    %190 = vector.load %arg5[%c8_90, %c8_91] : memref<72x72xf32, #tpu.memory_space<vmem>>, vector<64x64xf32>
    %191 = vector.broadcast %189 : f32 to vector<64x64xf32>
    %192 = arith.mulf %191, %190 : vector<64x64xf32>
    %193 = arith.addf %188, %192 : vector<64x64xf32>
    %c4_92 = arith.constant 4 : index
    %c4_93 = arith.constant 4 : index
    %194 = vector.load %arg4[%c4_92, %c4_93] : memref<72x72xf32, #tpu.memory_space<vmem>>, vector<64x64xf32>
    tpu.vector_store %arg4[%c4_92, %c4_93], %193 {strides = array<i32>} : memref<72x72xf32, #tpu.memory_space<vmem>>, vector<64x64xf32>,
    %cst_94 = arith.constant 0.000000e+00 : f32
    %195 = vector.broadcast %cst_94 : f32 to vector<64x64xf32>
    %c36 = arith.constant 36 : index
    %196 = memref.load %arg1[%c36] : memref<45xf32, #tpu.memory_space<smem>>
    %c0_95 = arith.constant 0 : index
    %c0_96 = arith.constant 0 : index
    %197 = vector.load %arg4[%c0_95, %c0_96] : memref<72x72xf32, #tpu.memory_space<vmem>>, vector<64x64xf32>
    %198 = vector.broadcast %196 : f32 to vector<64x64xf32>
    %199 = arith.mulf %198, %197 : vector<64x64xf32>
    %200 = arith.addf %195, %199 : vector<64x64xf32>
    %c37 = arith.constant 37 : index
    %201 = memref.load %arg1[%c37] : memref<45xf32, #tpu.memory_space<smem>>
    %c0_97 = arith.constant 0 : index
    %c4_98 = arith.constant 4 : index
    %202 = vector.load %arg4[%c0_97, %c4_98] : memref<72x72xf32, #tpu.memory_space<vmem>>, vector<64x64xf32>
    %203 = vector.broadcast %201 : f32 to vector<64x64xf32>
    %204 = arith.mulf %203, %202 : vector<64x64xf32>
    %205 = arith.addf %200, %204 : vector<64x64xf32>
    %c38 = arith.constant 38 : index
    %206 = memref.load %arg1[%c38] : memref<45xf32, #tpu.memory_space<smem>>
    %c0_99 = arith.constant 0 : index
    %c8_100 = arith.constant 8 : index
    %207 = vector.load %arg4[%c0_99, %c8_100] : memref<72x72xf32, #tpu.memory_space<vmem>>, vector<64x64xf32>
    %208 = vector.broadcast %206 : f32 to vector<64x64xf32>
    %209 = arith.mulf %208, %207 : vector<64x64xf32>
    %210 = arith.addf %205, %209 : vector<64x64xf32>
    %c39 = arith.constant 39 : index
    %211 = memref.load %arg1[%c39] : memref<45xf32, #tpu.memory_space<smem>>
    %c4_101 = arith.constant 4 : index
    %c0_102 = arith.constant 0 : index
    %212 = vector.load %arg4[%c4_101, %c0_102] : memref<72x72xf32, #tpu.memory_space<vmem>>, vector<64x64xf32>
    %213 = vector.broadcast %211 : f32 to vector<64x64xf32>
    %214 = arith.mulf %213, %212 : vector<64x64xf32>
    %215 = arith.addf %210, %214 : vector<64x64xf32>
    %c40 = arith.constant 40 : index
    %216 = memref.load %arg1[%c40] : memref<45xf32, #tpu.memory_space<smem>>
    %c4_103 = arith.constant 4 : index
    %c4_104 = arith.constant 4 : index
    %217 = vector.load %arg4[%c4_103, %c4_104] : memref<72x72xf32, #tpu.memory_space<vmem>>, vector<64x64xf32>
    %218 = vector.broadcast %216 : f32 to vector<64x64xf32>
    %219 = arith.mulf %218, %217 : vector<64x64xf32>
    %220 = arith.addf %215, %219 : vector<64x64xf32>
    %c41 = arith.constant 41 : index
    %221 = memref.load %arg1[%c41] : memref<45xf32, #tpu.memory_space<smem>>
    %c4_105 = arith.constant 4 : index
    %c8_106 = arith.constant 8 : index
    %222 = vector.load %arg4[%c4_105, %c8_106] : memref<72x72xf32, #tpu.memory_space<vmem>>, vector<64x64xf32>
    %223 = vector.broadcast %221 : f32 to vector<64x64xf32>
    %224 = arith.mulf %223, %222 : vector<64x64xf32>
    %225 = arith.addf %220, %224 : vector<64x64xf32>
    %c42 = arith.constant 42 : index
    %226 = memref.load %arg1[%c42] : memref<45xf32, #tpu.memory_space<smem>>
    %c8_107 = arith.constant 8 : index
    %c0_108 = arith.constant 0 : index
    %227 = vector.load %arg4[%c8_107, %c0_108] : memref<72x72xf32, #tpu.memory_space<vmem>>, vector<64x64xf32>
    %228 = vector.broadcast %226 : f32 to vector<64x64xf32>
    %229 = arith.mulf %228, %227 : vector<64x64xf32>
    %230 = arith.addf %225, %229 : vector<64x64xf32>
    %c43 = arith.constant 43 : index
    %231 = memref.load %arg1[%c43] : memref<45xf32, #tpu.memory_space<smem>>
    %c8_109 = arith.constant 8 : index
    %c4_110 = arith.constant 4 : index
    %232 = vector.load %arg4[%c8_109, %c4_110] : memref<72x72xf32, #tpu.memory_space<vmem>>, vector<64x64xf32>
    %233 = vector.broadcast %231 : f32 to vector<64x64xf32>
    %234 = arith.mulf %233, %232 : vector<64x64xf32>
    %235 = arith.addf %230, %234 : vector<64x64xf32>
    %c44 = arith.constant 44 : index
    %236 = memref.load %arg1[%c44] : memref<45xf32, #tpu.memory_space<smem>>
    %c8_111 = arith.constant 8 : index
    %c8_112 = arith.constant 8 : index
    %237 = vector.load %arg4[%c8_111, %c8_112] : memref<72x72xf32, #tpu.memory_space<vmem>>, vector<64x64xf32>
    %238 = vector.broadcast %236 : f32 to vector<64x64xf32>
    %239 = arith.mulf %238, %237 : vector<64x64xf32>
    %240 = arith.addf %235, %239 : vector<64x64xf32>
    %c0_113 = arith.constant 0 : index
    %c0_114 = arith.constant 0 : index
    %c0_115 = arith.constant 0 : index
    %241 = vector.load %arg3[%c0_113, %c0_114, %c0_115] : memref<1x64x64xf32, #tpu.memory_space<vmem>>, vector<1x64x64xf32>
    %242 = vector.shape_cast %241 : vector<1x64x64xf32> to vector<64x64xf32>
    %243 = vector.shape_cast %240 : vector<64x64xf32> to vector<1x64x64xf32>
    tpu.vector_store %arg3[%c0_113, %c0_114, %c0_115], %243 {strides = array<i32>} : memref<1x64x64xf32, #tpu.memory_space<vmem>>, vector<1x64x64xf32>,
    return
  }
  func.func @transform_0(%arg0: i32) -> i32 {
    %c0_i32 = arith.constant 0 : i32
    %c0_i32_0 = arith.constant 0 : i32
    return %c0_i32 : i32
  }
  func.func @transform_1(%arg0: i32) -> (i32, i32, i32) {
    %c0_i32 = arith.constant 0 : i32
    %c0_i32_0 = arith.constant 0 : i32
    %c0_i32_1 = arith.constant 0 : i32
    return %arg0, %c0_i32, %c0_i32_0 : i32, i32, i32
  }
  func.func @transform_2(%arg0: i32) -> (i32, i32, i32) {
    %c0_i32 = arith.constant 0 : i32
    %c0_i32_0 = arith.constant 0 : i32
    %c0_i32_1 = arith.constant 0 : i32
    return %arg0, %c0_i32, %c0_i32_0 : i32, i32, i32
  }
}

</mosaic_0001>

<llo_original>
// kernel: tpu_custom_call.1
$region0: #{tpu_custom_call.1}
  #allocation0 [shape = 'u32[]', space=smem, size = 0x4, offset = 0x4, fixed_abs, tag = 'smem constant byte address 0x4 - core index']
  #allocation1 [shape = 'u32[144,128]{1,0:T(1,128)}', space=vmem, size = 0x12000, scoped, tag = 'internal scratch']
  #allocation2 [shape = 'f32[72,72]{1,0:T(8,128)}', space=vmem, size = 0x9000, scoped, tag = 'scratch operand']
  #allocation3 [shape = 'f32[72,72]{1,0:T(8,128)}', space=vmem, size = 0x9000, scoped, tag = 'scratch operand']
  %s0 = inlined_call_operand.hbm [shape: f32[45], index: 0, kind: input, shape index: {}]
  %s1 = inlined_call_operand.hbm [shape: f32[2,64,64], index: 1, kind: input, shape index: {}]
  %s2 = inlined_call_operand.hbm [shape: f32[2,64,64], index: 2, kind: output, shape index: {}]
  %s3 = sld [smem:[#allocation0]]
  $region49: #{tpu_custom_call.1} parent=0
    _
  %s5 = ssub.s32 1, %s3
  %s6 = scalar_select 0, %s5, %s3
  $region1: #{tpu_custom_call.1} parent=0
    #allocation4 [shape = 'u8[512]{0}', space=smem, size = 0x200, scoped, tag = 'input window, operand 0, single buffered']
    #allocation5 [shape = 's32[2]{0}', space=sflag, size = 0x8, scoped, tag = 'scoped memory for tpu_custom_call.1']
    #allocation6 [shape = 's32[2]{0}', space=sflag, size = 0x8, scoped, tag = 'scoped memory for tpu_custom_call.1']
    #allocation7 [shape = 's32[2]{0}', space=sflag, size = 0x8, scoped, tag = 'scoped memory for tpu_custom_call.1']
    #allocation8 [shape = 'u8[65536]{0}', space=vmem, size = 0x10000, scoped, tag = 'input window, operand 1']
    #allocation9 [shape = 'u8[65536]{0}', space=vmem, size = 0x10000, scoped, tag = 'output window, operand 0']
    %7 = vsyncpa [#allocation7], 0
    %8 = vsyncpa [#allocation5], 0
    %s9 = scalar_lea.sflag [#allocation5], 1
    %10 = vsyncpa %s9, 0
    %11 = vsyncpa [#allocation6], 0
    %s12 = scalar_lea.sflag [#allocation6], 1
    %13 = vsyncpa %s12, 0
    loop: start=0, step=1, limit=4
    $region2: #{tpu_custom_call.1} parent=1 // loop_pre_header
      _
    $region3: #{tpu_custom_call.1} parent=1 // loop_header
      %s15 = sphi 0, %s19
      %p16 = scmp.ge.s32.totalorder %s15, 4
      %s23 = sphi 0, %s23
      %s25 = sphi 0, %s23
      %s26 = sphi 0, %s25
      %s40 = sphi 0, %s26
      %s46 = sphi 0, %s48
      %s49 = sphi 0, %s46
      %s50 = sphi 0, %s49
      %s66 = sphi 0, %s50
      %s72 = sphi 0, %s74
      %s75 = sphi 0, %s72
      %s76 = sphi 0, %s75
      %s92 = sphi 0, %s76
    $region4: #{tpu_custom_call.1} parent=1 // loop_header_branch
      %18 = sbr.rel (%p16) target = $region8
    $region5: #{tpu_custom_call.1} parent=1 // loop_body
      %s20 = ssub.s32 %s15, 1
      %s21 = ssub.s32 %s15, 2
      %s22 = sadd.s32 %s15, 1
      %s24 = sadd.s32 %s23, 1
      %p27 = scmp.eq.s32.totalorder %s15, 1
      %p28 = scmp.ne.s32.totalorder %s23, %s25
      %p29 = scmp.eq.s32.totalorder %s15, 0
      %p30 = por %p28, %p29
      %p31 = scmp.ne.s32.totalorder %s23, %s25
      %p32 = scmp.eq.s32.totalorder %s20, 1
      %p33 = por %p31, %p32
      %p34 = scmp.ne.s32.totalorder %s25, %s26
      %p35 = scmp.eq.s32.totalorder %s20, 0
      %p36 = por %p34, %p35
      %p37 = scmp.ne.s32.totalorder %s25, %s26
      %p38 = scmp.eq.s32.totalorder %s21, 1
      %p39 = por %p37, %p38
      %p41 = scmp.ne.s32.totalorder %s26, %s40
      %p42 = scmp.eq.s32.totalorder %s21, 0
      %p43 = por %p41, %p42
      %s44 = ssub.s32 %s15, %s22
      %p45 = scmp.eq.s32.totalorder %s44, 0
      %s47 = sadd.s32 %s46, 1
      %s48 = scalar_select %p45, %s46, %s47
      %p51 = pneg %p45
      %p52 = scmp.eq.s32.totalorder %s15, 1
      %p53 = por %p51, %p52
      %p54 = scmp.ne.s32.totalorder %s46, %s49
      %p55 = scmp.eq.s32.totalorder %s15, 0
      %p56 = por %p54, %p55
      %p57 = scmp.ne.s32.totalorder %s46, %s49
      %p58 = scmp.eq.s32.totalorder %s20, 1
      %p59 = por %p57, %p58
      %p60 = scmp.ne.s32.totalorder %s49, %s50
      %p61 = scmp.eq.s32.totalorder %s20, 0
      %p62 = por %p60, %p61
      %p63 = scmp.ne.s32.totalorder %s49, %s50
      %p64 = scmp.eq.s32.totalorder %s21, 1
      %p65 = por %p63, %p64
      %p67 = scmp.ne.s32.totalorder %s50, %s66
      %p68 = scmp.eq.s32.totalorder %s21, 0
      %p69 = por %p67, %p68
      %s70 = ssub.s32 %s15, %s22
      %p71 = scmp.eq.s32.totalorder %s70, 0
      %s73 = sadd.s32 %s72, 1
      %s74 = scalar_select %p71, %s72, %s73
      %p77 = pneg %p71
      %p78 = scmp.eq.s32.totalorder %s15, 1
      %p79 = por %p77, %p78
      %p80 = scmp.ne.s32.totalorder %s72, %s75
      %p81 = scmp.eq.s32.totalorder %s15, 0
      %p82 = por %p80, %p81
      %p83 = scmp.ne.s32.totalorder %s72, %s75
      %p84 = scmp.eq.s32.totalorder %s20, 1
      %p85 = por %p83, %p84
      %p86 = scmp.ne.s32.totalorder %s75, %s76
      %p87 = scmp.eq.s32.totalorder %s20, 0
      %p88 = por %p86, %p87
      %p89 = scmp.ne.s32.totalorder %s75, %s76
      %p90 = scmp.eq.s32.totalorder %s21, 1
      %p91 = por %p89, %p90
      %p93 = scmp.ne.s32.totalorder %s76, %s92
      %p94 = scmp.eq.s32.totalorder %s21, 0
      %p95 = por %p93, %p94
      %p96 = scmp.le.s32.totalorder 1, %s15
      %p97 = scmp.lt.s32.totalorder %s15, 3
      %p98 = pnand %p96, %p97
      %p99 = pneg %p98
      // Predicated region
      $region9: #{tpu_custom_call.1} parent=5 // pred_check
        _
      $region10: #{tpu_custom_call.1} parent=5 // pred_check_branch
        %101 = sbr.rel (%p98) target = $region12
      $region11: #{tpu_custom_call.1} parent=5 // pred_region
        %s102 = ssub.s32 %s15, 1
        // Predicated region
        $region13: #{tpu_custom_call.1} parent=11 // pred_check
          %p103 = pneg %p36
        $region14: #{tpu_custom_call.1} parent=11 // pred_check_branch
          %105 = sbr.rel (%p103) target = $region16
        $region15: #{tpu_custom_call.1} parent=11 // pred_region
          %s107 = ssub.s32 16, 16
          %108 = vsyncadd [#allocation7], %s107
          %111 = dma.hbm_to_smem %s0, 16, [#allocation4], [#allocation7]
        $region16: #{tpu_custom_call.1} parent=11 // pred_fallthru
          _
      $region12: #{tpu_custom_call.1} parent=5 // pred_fallthru
        _
      %p112 = scmp.lt.s32.totalorder %s15, 2
      // Predicated region
      $region17: #{tpu_custom_call.1} parent=5 // pred_check
        %p113 = pneg %p112
      $region18: #{tpu_custom_call.1} parent=5 // pred_check_branch
        %115 = sbr.rel (%p113) target = $region20
      $region19: #{tpu_custom_call.1} parent=5 // pred_region
        // Predicated region
        $region21: #{tpu_custom_call.1} parent=19 // pred_check
          %p116 = pneg %p56
        $region22: #{tpu_custom_call.1} parent=19 // pred_check_branch
          %118 = sbr.rel (%p116) target = $region24
        $region23: #{tpu_custom_call.1} parent=19 // pred_region
          %s119 = sand.u32 %s46, 1
          %s120 = scalar_lea.sflag [#allocation5], %s119
          %s121 = sand.u32 %s46, 1
          %s122 = smul.addr %s121, 64
          %s123 = scalar_lea.vmem [#allocation8], %s122
          %s125 = ssub.s32 1024, 1024
          %126 = vsyncadd %s120, %s125
          %s127 = smul.addr %s15, 8
          %s128 = smul.addr %s127, 128
          %s129 = scalar_lea.hbm %s1, %s128
          %s130 = sshll.u32 %s123, 4
          %s131 = int_to_ptr.vmem [resolvable:$true] %s130
          %136 = dma.hbm_to_vmem [thread:$0]  %s129, 1024, %s131, %s120, 128, 128, 8
        $region24: #{tpu_custom_call.1} parent=19 // pred_fallthru
          _
      $region20: #{tpu_custom_call.1} parent=5 // pred_fallthru
        _
      %p137 = scmp.le.s32.totalorder 1, %s15
      %p138 = scmp.lt.s32.totalorder %s15, 3
      %p139 = pnand %p137, %p138
      %p140 = pneg %p139
      // Predicated region
      $region25: #{tpu_custom_call.1} parent=5 // pred_check
        _
      $region26: #{tpu_custom_call.1} parent=5 // pred_check_branch
        %142 = sbr.rel (%p139) target = $region28
      $region27: #{tpu_custom_call.1} parent=5 // pred_region
        %s143 = ssub.s32 %s15, 1
        // Predicated region
        $region29: #{tpu_custom_call.1} parent=27 // pred_check
          %p144 = pneg %p36
        $region30: #{tpu_custom_call.1} parent=27 // pred_check_branch
          %146 = sbr.rel (%p144) target = $region32
        $region31: #{tpu_custom_call.1} parent=27 // pred_region
          %147 = dma.done [#allocation7], 16
        $region32: #{tpu_custom_call.1} parent=27 // pred_fallthru
          _
        %s148 = sand.u32 %s49, 1
        %s149 = scalar_lea.sflag [#allocation5], %s148
        %s150 = sand.u32 %s49, 1
        %s151 = smul.addr %s150, 64
        %s152 = scalar_lea.vmem [#allocation8], %s151
        // Predicated region
        $region33: #{tpu_custom_call.1} parent=27 // pred_check
          %p153 = pneg %p62
        $region34: #{tpu_custom_call.1} parent=27 // pred_check_branch
          %155 = sbr.rel (%p153) target = $region36
        $region35: #{tpu_custom_call.1} parent=27 // pred_region
          %156 = dma.done %s149, 1024
        $region36: #{tpu_custom_call.1} parent=27 // pred_fallthru
          _
        %157 = sfence
        %p158 = pneg %p36
        %p159 = pneg %p33
        %s160 = sand.u32 %s49, 1
        %s161 = scalar_lea.sflag [#allocation5], %s160
        %s162 = sand.u32 %s49, 1
        %s163 = smul.addr %s162, 64
        %s164 = scalar_lea.vmem [#allocation8], %s163
        %p165 = pneg %p62
        %p166 = pneg %p59
        %p167 = pneg %p88
        %p168 = pneg %p85
        %s169 = sand.u32 %s75, 1
        %s170 = scalar_lea.sflag [#allocation6], %s169
        %s171 = sand.u32 %s75, 1
        %s172 = smul.addr %s171, 64
        %s173 = scalar_lea.vmem [#allocation9], %s172
        %vm174 = vcmask 588800
        %175 = vst.msk [vmem:[#allocation2] sm:$0xff] %vm174, 0.0
        %176 = vst.msk [vmem:[#allocation2 + $0x8] sm:$0xff] %vm174, 0.0
        %177 = vst.msk [vmem:[#allocation2 + $0x10] sm:$0xff] %vm174, 0.0
        %178 = vst.msk [vmem:[#allocation2 + $0x18] sm:$0xff] %vm174, 0.0
        %179 = vst.msk [vmem:[#allocation2 + $0x20] sm:$0xff] %vm174, 0.0
        %180 = vst.msk [vmem:[#allocation2 + $0x28] sm:$0xff] %vm174, 0.0
        %181 = vst.msk [vmem:[#allocation2 + $0x30] sm:$0xff] %vm174, 0.0
        %182 = vst.msk [vmem:[#allocation2 + $0x38] sm:$0xff] %vm174, 0.0
        %183 = vst.msk [vmem:[#allocation2 + $0x40] sm:$0xff] %vm174, 0.0
        %184 = vst.msk [vmem:[#allocation3] sm:$0xff] %vm174, 0.0
        %185 = vst.msk [vmem:[#allocation3 + $0x8] sm:$0xff] %vm174, 0.0
        %186 = vst.msk [vmem:[#allocation3 + $0x10] sm:$0xff] %vm174, 0.0
        %187 = vst.msk [vmem:[#allocation3 + $0x18] sm:$0xff] %vm174, 0.0
        %188 = vst.msk [vmem:[#allocation3 + $0x20] sm:$0xff] %vm174, 0.0
        %189 = vst.msk [vmem:[#allocation3 + $0x28] sm:$0xff] %vm174, 0.0
        %190 = vst.msk [vmem:[#allocation3 + $0x30] sm:$0xff] %vm174, 0.0
        %191 = vst.msk [vmem:[#allocation3 + $0x38] sm:$0xff] %vm174, 0.0
        %192 = vst.msk [vmem:[#allocation3 + $0x40] sm:$0xff] %vm174, 0.0
        %v193 = vld [vmem:[%s152] sm:$0xff]
        %v194 = vld [vmem:[%s152 + $0x8] sm:$0xff]
        %v195 = vld [vmem:[%s152 + $0x10] sm:$0xff]
        %v196 = vld [vmem:[%s152 + $0x18] sm:$0xff]
        %v197 = vld [vmem:[%s152 + $0x20] sm:$0xff]
        %v198 = vld [vmem:[%s152 + $0x28] sm:$0xff]
        %v199 = vld [vmem:[%s152 + $0x30] sm:$0xff]
        %v200 = vld [vmem:[%s152 + $0x38] sm:$0xff]
        %209 = vrot.lane.b32.xlu0 %v193, 4
        %v210 = vpop.permute.xlu0 %209
        %211 = vrot.lane.b32.xlu0 %v194, 4
        %v212 = vpop.permute.xlu0 %211
        %213 = vrot.lane.b32.xlu0 %v195, 4
        %v214 = vpop.permute.xlu0 %213
        %215 = vrot.lane.b32.xlu0 %v196, 4
        %v216 = vpop.permute.xlu0 %215
        %217 = vrot.lane.b32.xlu0 %v197, 4
        %v218 = vpop.permute.xlu0 %217
        %219 = vrot.lane.b32.xlu0 %v198, 4
        %v220 = vpop.permute.xlu0 %219
        %221 = vrot.lane.b32.xlu0 %v199, 4
        %v222 = vpop.permute.xlu0 %221
        %223 = vrot.lane.b32.xlu0 %v200, 4
        %v224 = vpop.permute.xlu0 %223
        %vm233 = vcmask 556064
        %234 = vst.msk [vmem:[#allocation2 + $0x4] sm:$0xff] %vm233, %v210
        %235 = vst.msk [vmem:[#allocation2 + $0xc] sm:$0xff] %vm233, %v212
        %236 = vst.msk [vmem:[#allocation2 + $0x14] sm:$0xff] %vm233, %v214
        %237 = vst.msk [vmem:[#allocation2 + $0x1c] sm:$0xff] %vm233, %v216
        %238 = vst.msk [vmem:[#allocation2 + $0x24] sm:$0xff] %vm233, %v218
        %239 = vst.msk [vmem:[#allocation2 + $0x2c] sm:$0xff] %vm233, %v220
        %240 = vst.msk [vmem:[#allocation2 + $0x34] sm:$0xff] %vm233, %v222
        %241 = vst.msk [vmem:[#allocation2 + $0x3c] sm:$0xff] %vm233, %v224
        %s242 = sld [smem:[#allocation4]]
        %v243 = vld [vmem:[#allocation2 + $0x3] sm:$0xff]
        %v244 = vld [vmem:[#allocation2 + $0xb] sm:$0xff]
        %v245 = vld [vmem:[#allocation2 + $0x13] sm:$0xff]
        %v246 = vld [vmem:[#allocation2 + $0x1b] sm:$0xff]
        %v247 = vld [vmem:[#allocation2 + $0x23] sm:$0xff]
        %v248 = vld [vmem:[#allocation2 + $0x2b] sm:$0xff]
        %v249 = vld [vmem:[#allocation2 + $0x33] sm:$0xff]
        %v250 = vld [vmem:[#allocation2 + $0x3b] sm:$0xff]
        %v251 = vstv %s242
        %v252 = vmul.f32 %v251, %v243
        %v253 = vmul.f32 %v251, %v244
        %v254 = vmul.f32 %v251, %v245
        %v255 = vmul.f32 %v251, %v246
        %v256 = vmul.f32 %v251, %v247
        %v257 = vmul.f32 %v251, %v248
        %v258 = vmul.f32 %v251, %v249
        %v259 = vmul.f32 %v251, %v250
        %v260 = vadd.f32 %v252, 0.0
        %v261 = vadd.f32 %v253, 0.0
        %v262 = vadd.f32 %v254, 0.0
        %v263 = vadd.f32 %v255, 0.0
        %v264 = vadd.f32 %v256, 0.0
        %v265 = vadd.f32 %v257, 0.0
        %v266 = vadd.f32 %v258, 0.0
        %v267 = vadd.f32 %v259, 0.0
        %s268 = sld [smem:[#allocation4 + $0x1]]
        %v269 = vstv %s268
        %v270 = vmul.f32 %v269, %v243
        %v271 = vmul.f32 %v269, %v244
        %v272 = vmul.f32 %v269, %v245
        %v273 = vmul.f32 %v269, %v246
        %v274 = vmul.f32 %v269, %v247
        %v275 = vmul.f32 %v269, %v248
        %v276 = vmul.f32 %v269, %v249
        %v277 = vmul.f32 %v269, %v250
        %286 = vrot.lane.b32.xlu0 %v270, 127
        %v287 = vpop.permute.xlu0 %286
        %288 = vrot.lane.b32.xlu0 %v271, 127
        %v289 = vpop.permute.xlu0 %288
        %290 = vrot.lane.b32.xlu0 %v272, 127
        %v291 = vpop.permute.xlu0 %290
        %292 = vrot.lane.b32.xlu0 %v273, 127
        %v293 = vpop.permute.xlu0 %292
        %294 = vrot.lane.b32.xlu0 %v274, 127
        %v295 = vpop.permute.xlu0 %294
        %296 = vrot.lane.b32.xlu0 %v275, 127
        %v297 = vpop.permute.xlu0 %296
        %298 = vrot.lane.b32.xlu0 %v276, 127
        %v299 = vpop.permute.xlu0 %298
        %300 = vrot.lane.b32.xlu0 %v277, 127
        %v301 = vpop.permute.xlu0 %300
        %v310 = vadd.f32 %v260, %v287
        %v311 = vadd.f32 %v261, %v289
        %v312 = vadd.f32 %v262, %v291
        %v313 = vadd.f32 %v263, %v293
        %v314 = vadd.f32 %v264, %v295
        %v315 = vadd.f32 %v265, %v297
        %v316 = vadd.f32 %v266, %v299
        %v317 = vadd.f32 %v267, %v301
        %s318 = sld [smem:[#allocation4 + $0x2]]
        %v319 = vstv %s318
        %v320 = vmul.f32 %v319, %v243
        %v321 = vmul.f32 %v319, %v244
        %v322 = vmul.f32 %v319, %v245
        %v323 = vmul.f32 %v319, %v246
        %v324 = vmul.f32 %v319, %v247
        %v325 = vmul.f32 %v319, %v248
        %v326 = vmul.f32 %v319, %v249
        %v327 = vmul.f32 %v319, %v250
        %336 = vrot.lane.b32.xlu0 %v320, 126
        %v337 = vpop.permute.xlu0 %336
        %338 = vrot.lane.b32.xlu0 %v321, 126
        %v339 = vpop.permute.xlu0 %338
        %340 = vrot.lane.b32.xlu0 %v322, 126
        %v341 = vpop.permute.xlu0 %340
        %342 = vrot.lane.b32.xlu0 %v323, 126
        %v343 = vpop.permute.xlu0 %342
        %344 = vrot.lane.b32.xlu0 %v324, 126
        %v345 = vpop.permute.xlu0 %344
        %346 = vrot.lane.b32.xlu0 %v325, 126
        %v347 = vpop.permute.xlu0 %346
        %348 = vrot.lane.b32.xlu0 %v326, 126
        %v349 = vpop.permute.xlu0 %348
        %350 = vrot.lane.b32.xlu0 %v327, 126
        %v351 = vpop.permute.xlu0 %350
        %v360 = vadd.f32 %v310, %v337
        %v361 = vadd.f32 %v311, %v339
        %v362 = vadd.f32 %v312, %v341
        %v363 = vadd.f32 %v313, %v343
        %v364 = vadd.f32 %v314, %v345
        %v365 = vadd.f32 %v315, %v347
        %v366 = vadd.f32 %v316, %v349
        %v367 = vadd.f32 %v317, %v351
        %s368 = sld [smem:[#allocation4 + $0x3]]
        %v369 = vld [vmem:[#allocation2 + $0x4] sm:$0xff]
        %v370 = vld [vmem:[#allocation2 + $0xc] sm:$0xff]
        %v371 = vld [vmem:[#allocation2 + $0x14] sm:$0xff]
        %v372 = vld [vmem:[#allocation2 + $0x1c] sm:$0xff]
        %v373 = vld [vmem:[#allocation2 + $0x24] sm:$0xff]
        %v374 = vld [vmem:[#allocation2 + $0x2c] sm:$0xff]
        %v375 = vld [vmem:[#allocation2 + $0x34] sm:$0xff]
        %v376 = vld [vmem:[#allocation2 + $0x3c] sm:$0xff]
        %v377 = vstv %s368
        %v378 = vmul.f32 %v377, %v369
        %v379 = vmul.f32 %v377, %v370
        %v380 = vmul.f32 %v377, %v371
        %v381 = vmul.f32 %v377, %v372
        %v382 = vmul.f32 %v377, %v373
        %v383 = vmul.f32 %v377, %v374
        %v384 = vmul.f32 %v377, %v375
        %v385 = vmul.f32 %v377, %v376
        %v386 = vadd.f32 %v360, %v378
        %v387 = vadd.f32 %v361, %v379
        %v388 = vadd.f32 %v362, %v380
        %v389 = vadd.f32 %v363, %v381
        %v390 = vadd.f32 %v364, %v382
        %v391 = vadd.f32 %v365, %v383
        %v392 = vadd.f32 %v366, %v384
        %v393 = vadd.f32 %v367, %v385
        %s394 = sld [smem:[#allocation4 + $0x4]]
        %v395 = vstv %s394
        %v396 = vmul.f32 %v395, %v369
        %v397 = vmul.f32 %v395, %v370
        %v398 = vmul.f32 %v395, %v371
        %v399 = vmul.f32 %v395, %v372
        %v400 = vmul.f32 %v395, %v373
        %v401 = vmul.f32 %v395, %v374
        %v402 = vmul.f32 %v395, %v375
        %v403 = vmul.f32 %v395, %v376
        %412 = vrot.lane.b32.xlu0 %v396, 127
        %v413 = vpop.permute.xlu0 %412
        %414 = vrot.lane.b32.xlu0 %v397, 127
        %v415 = vpop.permute.xlu0 %414
        %416 = vrot.lane.b32.xlu0 %v398, 127
        %v417 = vpop.permute.xlu0 %416
        %418 = vrot.lane.b32.xlu0 %v399, 127
        %v419 = vpop.permute.xlu0 %418
        %420 = vrot.lane.b32.xlu0 %v400, 127
        %v421 = vpop.permute.xlu0 %420
        %422 = vrot.lane.b32.xlu0 %v401, 127
        %v423 = vpop.permute.xlu0 %422
        %424 = vrot.lane.b32.xlu0 %v402, 127
        %v425 = vpop.permute.xlu0 %424
        %426 = vrot.lane.b32.xlu0 %v403, 127
        %v427 = vpop.permute.xlu0 %426
        %v436 = vadd.f32 %v386, %v413
        %v437 = vadd.f32 %v387, %v415
        %v438 = vadd.f32 %v388, %v417
        %v439 = vadd.f32 %v389, %v419
        %v440 = vadd.f32 %v390, %v421
        %v441 = vadd.f32 %v391, %v423
        %v442 = vadd.f32 %v392, %v425
        %v443 = vadd.f32 %v393, %v427
        %s444 = sld [smem:[#allocation4 + $0x5]]
        %v445 = vstv %s444
        %v446 = vmul.f32 %v445, %v369
        %v447 = vmul.f32 %v445, %v370
        %v448 = vmul.f32 %v445, %v371
        %v449 = vmul.f32 %v445, %v372
        %v450 = vmul.f32 %v445, %v373
        %v451 = vmul.f32 %v445, %v374
        %v452 = vmul.f32 %v445, %v375
        %v453 = vmul.f32 %v445, %v376
        %462 = vrot.lane.b32.xlu0 %v446, 126
        %v463 = vpop.permute.xlu0 %462
        %464 = vrot.lane.b32.xlu0 %v447, 126
        %v465 = vpop.permute.xlu0 %464
        %466 = vrot.lane.b32.xlu0 %v448, 126
        %v467 = vpop.permute.xlu0 %466
        %468 = vrot.lane.b32.xlu0 %v449, 126
        %v469 = vpop.permute.xlu0 %468
        %470 = vrot.lane.b32.xlu0 %v450, 126
        %v471 = vpop.permute.xlu0 %470
        %472 = vrot.lane.b32.xlu0 %v451, 126
        %v473 = vpop.permute.xlu0 %472
        %474 = vrot.lane.b32.xlu0 %v452, 126
        %v475 = vpop.permute.xlu0 %474
        %476 = vrot.lane.b32.xlu0 %v453, 126
        %v477 = vpop.permute.xlu0 %476
        %v486 = vadd.f32 %v436, %v463
        %v487 = vadd.f32 %v437, %v465
        %v488 = vadd.f32 %v438, %v467
        %v489 = vadd.f32 %v439, %v469
        %v490 = vadd.f32 %v440, %v471
        %v491 = vadd.f32 %v441, %v473
        %v492 = vadd.f32 %v442, %v475
        %v493 = vadd.f32 %v443, %v477
        %s494 = sld [smem:[#allocation4 + $0x6]]
        %v495 = vld [vmem:[#allocation2 + $0x5] sm:$0xff]
        %v496 = vld [vmem:[#allocation2 + $0xd] sm:$0xff]
        %v497 = vld [vmem:[#allocation2 + $0x15] sm:$0xff]
        %v498 = vld [vmem:[#allocation2 + $0x1d] sm:$0xff]
        %v499 = vld [vmem:[#allocation2 + $0x25] sm:$0xff]
        %v500 = vld [vmem:[#allocation2 + $0x2d] sm:$0xff]
        %v501 = vld [vmem:[#allocation2 + $0x35] sm:$0xff]
        %v502 = vld [vmem:[#allocation2 + $0x3d] sm:$0xff]
        %v503 = vstv %s494
        %v504 = vmul.f32 %v503, %v495
        %v505 = vmul.f32 %v503, %v496
        %v506 = vmul.f32 %v503, %v497
        %v507 = vmul.f32 %v503, %v498
        %v508 = vmul.f32 %v503, %v499
        %v509 = vmul.f32 %v503, %v500
        %v510 = vmul.f32 %v503, %v501
        %v511 = vmul.f32 %v503, %v502
        %v512 = vadd.f32 %v486, %v504
        %v513 = vadd.f32 %v487, %v505
        %v514 = vadd.f32 %v488, %v506
        %v515 = vadd.f32 %v489, %v507
        %v516 = vadd.f32 %v490, %v508
        %v517 = vadd.f32 %v491, %v509
        %v518 = vadd.f32 %v492, %v510
        %v519 = vadd.f32 %v493, %v511
        %s520 = sld [smem:[#allocation4 + $0x7]]
        %v521 = vstv %s520
        %v522 = vmul.f32 %v521, %v495
        %v523 = vmul.f32 %v521, %v496
        %v524 = vmul.f32 %v521, %v497
        %v525 = vmul.f32 %v521, %v498
        %v526 = vmul.f32 %v521, %v499
        %v527 = vmul.f32 %v521, %v500
        %v528 = vmul.f32 %v521, %v501
        %v529 = vmul.f32 %v521, %v502
        %538 = vrot.lane.b32.xlu0 %v522, 127
        %v539 = vpop.permute.xlu0 %538
        %540 = vrot.lane.b32.xlu0 %v523, 127
        %v541 = vpop.permute.xlu0 %540
        %542 = vrot.lane.b32.xlu0 %v524, 127
        %v543 = vpop.permute.xlu0 %542
        %544 = vrot.lane.b32.xlu0 %v525, 127
        %v545 = vpop.permute.xlu0 %544
        %546 = vrot.lane.b32.xlu0 %v526, 127
        %v547 = vpop.permute.xlu0 %546
        %548 = vrot.lane.b32.xlu0 %v527, 127
        %v549 = vpop.permute.xlu0 %548
        %550 = vrot.lane.b32.xlu0 %v528, 127
        %v551 = vpop.permute.xlu0 %550
        %552 = vrot.lane.b32.xlu0 %v529, 127
        %v553 = vpop.permute.xlu0 %552
        %v562 = vadd.f32 %v512, %v539
        %v563 = vadd.f32 %v513, %v541
        %v564 = vadd.f32 %v514, %v543
        %v565 = vadd.f32 %v515, %v545
        %v566 = vadd.f32 %v516, %v547
        %v567 = vadd.f32 %v517, %v549
        %v568 = vadd.f32 %v518, %v551
        %v569 = vadd.f32 %v519, %v553
        %s570 = sld [smem:[#allocation4 + $0x8]]
        %v571 = vstv %s570
        %v572 = vmul.f32 %v571, %v495
        %v573 = vmul.f32 %v571, %v496
        %v574 = vmul.f32 %v571, %v497
        %v575 = vmul.f32 %v571, %v498
        %v576 = vmul.f32 %v571, %v499
        %v577 = vmul.f32 %v571, %v500
        %v578 = vmul.f32 %v571, %v501
        %v579 = vmul.f32 %v571, %v502
        %588 = vrot.lane.b32.xlu0 %v572, 126
        %v589 = vpop.permute.xlu0 %588
        %590 = vrot.lane.b32.xlu0 %v573, 126
        %v591 = vpop.permute.xlu0 %590
        %592 = vrot.lane.b32.xlu0 %v574, 126
        %v593 = vpop.permute.xlu0 %592
        %594 = vrot.lane.b32.xlu0 %v575, 126
        %v595 = vpop.permute.xlu0 %594
        %596 = vrot.lane.b32.xlu0 %v576, 126
        %v597 = vpop.permute.xlu0 %596
        %598 = vrot.lane.b32.xlu0 %v577, 126
        %v599 = vpop.permute.xlu0 %598
        %600 = vrot.lane.b32.xlu0 %v578, 126
        %v601 = vpop.permute.xlu0 %600
        %602 = vrot.lane.b32.xlu0 %v579, 126
        %v603 = vpop.permute.xlu0 %602
        %v612 = vadd.f32 %v562, %v589
        %v613 = vadd.f32 %v563, %v591
        %v614 = vadd.f32 %v564, %v593
        %v615 = vadd.f32 %v565, %v595
        %v616 = vadd.f32 %v566, %v597
        %v617 = vadd.f32 %v567, %v599
        %v618 = vadd.f32 %v568, %v601
        %v619 = vadd.f32 %v569, %v603
        %628 = vrot.lane.b32.xlu0 %v612, 1
        %v629 = vpop.permute.xlu0 %628
        %630 = vrot.lane.b32.xlu0 %v613, 1
        %v631 = vpop.permute.xlu0 %630
        %632 = vrot.lane.b32.xlu0 %v614, 1
        %v633 = vpop.permute.xlu0 %632
        %634 = vrot.lane.b32.xlu0 %v615, 1
        %v635 = vpop.permute.xlu0 %634
        %636 = vrot.lane.b32.xlu0 %v616, 1
        %v637 = vpop.permute.xlu0 %636
        %638 = vrot.lane.b32.xlu0 %v617, 1
        %v639 = vpop.permute.xlu0 %638
        %640 = vrot.lane.b32.xlu0 %v618, 1
        %v641 = vpop.permute.xlu0 %640
        %642 = vrot.lane.b32.xlu0 %v619, 1
        %v643 = vpop.permute.xlu0 %642
        %652 = vst.msk [vmem:[#allocation3 + $0x4] sm:$0xff] %vm233, %v629
        %653 = vst.msk [vmem:[#allocation3 + $0xc] sm:$0xff] %vm233, %v631
        %654 = vst.msk [vmem:[#allocation3 + $0x14] sm:$0xff] %vm233, %v633
        %655 = vst.msk [vmem:[#allocation3 + $0x1c] sm:$0xff] %vm233, %v635
        %656 = vst.msk [vmem:[#allocation3 + $0x24] sm:$0xff] %vm233, %v637
        %657 = vst.msk [vmem:[#allocation3 + $0x2c] sm:$0xff] %vm233, %v639
        %658 = vst.msk [vmem:[#allocation3 + $0x34] sm:$0xff] %vm233, %v641
        %659 = vst.msk [vmem:[#allocation3 + $0x3c] sm:$0xff] %vm233, %v643
        %s660 = sld [smem:[#allocation4 + $0x9]]
        %v661 = vld [vmem:[#allocation3 + $0x2] sm:$0xff]
        %v662 = vld [vmem:[#allocation3 + $0xa] sm:$0xff]
        %v663 = vld [vmem:[#allocation3 + $0x12] sm:$0xff]
        %v664 = vld [vmem:[#allocation3 + $0x1a] sm:$0xff]
        %v665 = vld [vmem:[#allocation3 + $0x22] sm:$0xff]
        %v666 = vld [vmem:[#allocation3 + $0x2a] sm:$0xff]
        %v667 = vld [vmem:[#allocation3 + $0x32] sm:$0xff]
        %v668 = vld [vmem:[#allocation3 + $0x3a] sm:$0xff]
        %v669 = vstv %s660
        %v670 = vmul.f32 %v669, %v661
        %v671 = vmul.f32 %v669, %v662
        %v672 = vmul.f32 %v669, %v663
        %v673 = vmul.f32 %v669, %v664
        %v674 = vmul.f32 %v669, %v665
        %v675 = vmul.f32 %v669, %v666
        %v676 = vmul.f32 %v669, %v667
        %v677 = vmul.f32 %v669, %v668
        %v678 = vadd.f32 %v670, 0.0
        %v679 = vadd.f32 %v671, 0.0
        %v680 = vadd.f32 %v672, 0.0
        %v681 = vadd.f32 %v673, 0.0
        %v682 = vadd.f32 %v674, 0.0
        %v683 = vadd.f32 %v675, 0.0
        %v684 = vadd.f32 %v676, 0.0
        %v685 = vadd.f32 %v677, 0.0
        %s686 = sld [smem:[#allocation4 + $0xa]]
        %v687 = vstv %s686
        %v688 = vmul.f32 %v687, %v661
        %v689 = vmul.f32 %v687, %v662
        %v690 = vmul.f32 %v687, %v663
        %v691 = vmul.f32 %v687, %v664
        %v692 = vmul.f32 %v687, %v665
        %v693 = vmul.f32 %v687, %v666
        %v694 = vmul.f32 %v687, %v667
        %v695 = vmul.f32 %v687, %v668
        %704 = vrot.lane.b32.xlu0 %v688, 126
        %v705 = vpop.permute.xlu0 %704
        %706 = vrot.lane.b32.xlu0 %v689, 126
        %v707 = vpop.permute.xlu0 %706
        %708 = vrot.lane.b32.xlu0 %v690, 126
        %v709 = vpop.permute.xlu0 %708
        %710 = vrot.lane.b32.xlu0 %v691, 126
        %v711 = vpop.permute.xlu0 %710
        %712 = vrot.lane.b32.xlu0 %v692, 126
        %v713 = vpop.permute.xlu0 %712
        %714 = vrot.lane.b32.xlu0 %v693, 126
        %v715 = vpop.permute.xlu0 %714
        %716 = vrot.lane.b32.xlu0 %v694, 126
        %v717 = vpop.permute.xlu0 %716
        %718 = vrot.lane.b32.xlu0 %v695, 126
        %v719 = vpop.permute.xlu0 %718
        %v728 = vadd.f32 %v678, %v705
        %v729 = vadd.f32 %v679, %v707
        %v730 = vadd.f32 %v680, %v709
        %v731 = vadd.f32 %v681, %v711
        %v732 = vadd.f32 %v682, %v713
        %v733 = vadd.f32 %v683, %v715
        %v734 = vadd.f32 %v684, %v717
        %v735 = vadd.f32 %v685, %v719
        %s736 = sld [smem:[#allocation4 + $0xb]]
        %v737 = vstv %s736
        %v738 = vmul.f32 %v737, %v661
        %v739 = vmul.f32 %v737, %v662
        %v740 = vmul.f32 %v737, %v663
        %v741 = vmul.f32 %v737, %v664
        %v742 = vmul.f32 %v737, %v665
        %v743 = vmul.f32 %v737, %v666
        %v744 = vmul.f32 %v737, %v667
        %v745 = vmul.f32 %v737, %v668
        %754 = vrot.lane.b32.xlu0 %v738, 124
        %v755 = vpop.permute.xlu0 %754
        %756 = vrot.lane.b32.xlu0 %v739, 124
        %v757 = vpop.permute.xlu0 %756
        %758 = vrot.lane.b32.xlu0 %v740, 124
        %v759 = vpop.permute.xlu0 %758
        %760 = vrot.lane.b32.xlu0 %v741, 124
        %v761 = vpop.permute.xlu0 %760
        %762 = vrot.lane.b32.xlu0 %v742, 124
        %v763 = vpop.permute.xlu0 %762
        %764 = vrot.lane.b32.xlu0 %v743, 124
        %v765 = vpop.permute.xlu0 %764
        %766 = vrot.lane.b32.xlu0 %v744, 124
        %v767 = vpop.permute.xlu0 %766
        %768 = vrot.lane.b32.xlu0 %v745, 124
        %v769 = vpop.permute.xlu0 %768
        %v778 = vadd.f32 %v728, %v755
        %v779 = vadd.f32 %v729, %v757
        %v780 = vadd.f32 %v730, %v759
        %v781 = vadd.f32 %v731, %v761
        %v782 = vadd.f32 %v732, %v763
        %v783 = vadd.f32 %v733, %v765
        %v784 = vadd.f32 %v734, %v767
        %v785 = vadd.f32 %v735, %v769
        %s786 = sld [smem:[#allocation4 + $0xc]]
        %v787 = vld [vmem:[#allocation3 + $0x4] sm:$0xff]
        %v788 = vld [vmem:[#allocation3 + $0xc] sm:$0xff]
        %v789 = vld [vmem:[#allocation3 + $0x14] sm:$0xff]
        %v790 = vld [vmem:[#allocation3 + $0x1c] sm:$0xff]
        %v791 = vld [vmem:[#allocation3 + $0x24] sm:$0xff]
        %v792 = vld [vmem:[#allocation3 + $0x2c] sm:$0xff]
        %v793 = vld [vmem:[#allocation3 + $0x34] sm:$0xff]
        %v794 = vld [vmem:[#allocation3 + $0x3c] sm:$0xff]
        %v795 = vstv %s786
        %v796 = vmul.f32 %v795, %v787
        %v797 = vmul.f32 %v795, %v788
        %v798 = vmul.f32 %v795, %v789
        %v799 = vmul.f32 %v795, %v790
        %v800 = vmul.f32 %v795, %v791
        %v801 = vmul.f32 %v795, %v792
        %v802 = vmul.f32 %v795, %v793
        %v803 = vmul.f32 %v795, %v794
        %v804 = vadd.f32 %v778, %v796
        %v805 = vadd.f32 %v779, %v797
        %v806 = vadd.f32 %v780, %v798
        %v807 = vadd.f32 %v781, %v799
        %v808 = vadd.f32 %v782, %v800
        %v809 = vadd.f32 %v783, %v801
        %v810 = vadd.f32 %v784, %v802
        %v811 = vadd.f32 %v785, %v803
        %s812 = sld [smem:[#allocation4 + $0xd]]
        %v813 = vstv %s812
        %v814 = vmul.f32 %v813, %v787
        %v815 = vmul.f32 %v813, %v788
        %v816 = vmul.f32 %v813, %v789
        %v817 = vmul.f32 %v813, %v790
        %v818 = vmul.f32 %v813, %v791
        %v819 = vmul.f32 %v813, %v792
        %v820 = vmul.f32 %v813, %v793
        %v821 = vmul.f32 %v813, %v794
        %830 = vrot.lane.b32.xlu0 %v814, 126
        %v831 = vpop.permute.xlu0 %830
        %832 = vrot.lane.b32.xlu0 %v815, 126
        %v833 = vpop.permute.xlu0 %832
        %834 = vrot.lane.b32.xlu0 %v816, 126
        %v835 = vpop.permute.xlu0 %834
        %836 = vrot.lane.b32.xlu0 %v817, 126
        %v837 = vpop.permute.xlu0 %836
        %838 = vrot.lane.b32.xlu0 %v818, 126
        %v839 = vpop.permute.xlu0 %838
        %840 = vrot.lane.b32.xlu0 %v819, 126
        %v841 = vpop.permute.xlu0 %840
        %842 = vrot.lane.b32.xlu0 %v820, 126
        %v843 = vpop.permute.xlu0 %842
        %844 = vrot.lane.b32.xlu0 %v821, 126
        %v845 = vpop.permute.xlu0 %844
        %v854 = vadd.f32 %v804, %v831
        %v855 = vadd.f32 %v805, %v833
        %v856 = vadd.f32 %v806, %v835
        %v857 = vadd.f32 %v807, %v837
        %v858 = vadd.f32 %v808, %v839
        %v859 = vadd.f32 %v809, %v841
        %v860 = vadd.f32 %v810, %v843
        %v861 = vadd.f32 %v811, %v845
        %s862 = sld [smem:[#allocation4 + $0xe]]
        %v863 = vstv %s862
        %v864 = vmul.f32 %v863, %v787
        %v865 = vmul.f32 %v863, %v788
        %v866 = vmul.f32 %v863, %v789
        %v867 = vmul.f32 %v863, %v790
        %v868 = vmul.f32 %v863, %v791
        %v869 = vmul.f32 %v863, %v792
        %v870 = vmul.f32 %v863, %v793
        %v871 = vmul.f32 %v863, %v794
        %880 = vrot.lane.b32.xlu0 %v864, 124
        %v881 = vpop.permute.xlu0 %880
        %882 = vrot.lane.b32.xlu0 %v865, 124
        %v883 = vpop.permute.xlu0 %882
        %884 = vrot.lane.b32.xlu0 %v866, 124
        %v885 = vpop.permute.xlu0 %884
        %886 = vrot.lane.b32.xlu0 %v867, 124
        %v887 = vpop.permute.xlu0 %886
        %888 = vrot.lane.b32.xlu0 %v868, 124
        %v889 = vpop.permute.xlu0 %888
        %890 = vrot.lane.b32.xlu0 %v869, 124
        %v891 = vpop.permute.xlu0 %890
        %892 = vrot.lane.b32.xlu0 %v870, 124
        %v893 = vpop.permute.xlu0 %892
        %894 = vrot.lane.b32.xlu0 %v871, 124
        %v895 = vpop.permute.xlu0 %894
        %v904 = vadd.f32 %v854, %v881
        %v905 = vadd.f32 %v855, %v883
        %v906 = vadd.f32 %v856, %v885
        %v907 = vadd.f32 %v857, %v887
        %v908 = vadd.f32 %v858, %v889
        %v909 = vadd.f32 %v859, %v891
        %v910 = vadd.f32 %v860, %v893
        %v911 = vadd.f32 %v861, %v895
        %s912 = sld [smem:[#allocation4 + $0xf]]
        %v913 = vld [vmem:[#allocation3 + $0x6] sm:$0xff]
        %v914 = vld [vmem:[#allocation3 + $0xe] sm:$0xff]
        %v915 = vld [vmem:[#allocation3 + $0x16] sm:$0xff]
        %v916 = vld [vmem:[#allocation3 + $0x1e] sm:$0xff]
        %v917 = vld [vmem:[#allocation3 + $0x26] sm:$0xff]
        %v918 = vld [vmem:[#allocation3 + $0x2e] sm:$0xff]
        %v919 = vld [vmem:[#allocation3 + $0x36] sm:$0xff]
        %v920 = vld [vmem:[#allocation3 + $0x3e] sm:$0xff]
        %v921 = vstv %s912
        %v922 = vmul.f32 %v921, %v913
        %v923 = vmul.f32 %v921, %v914
        %v924 = vmul.f32 %v921, %v915
        %v925 = vmul.f32 %v921, %v916
        %v926 = vmul.f32 %v921, %v917
        %v927 = vmul.f32 %v921, %v918
        %v928 = vmul.f32 %v921, %v919
        %v929 = vmul.f32 %v921, %v920
        %v930 = vadd.f32 %v904, %v922
        %v931 = vadd.f32 %v905, %v923
        %v932 = vadd.f32 %v906, %v924
        %v933 = vadd.f32 %v907, %v925
        %v934 = vadd.f32 %v908, %v926
        %v935 = vadd.f32 %v909, %v927
        %v936 = vadd.f32 %v910, %v928
        %v937 = vadd.f32 %v911, %v929
        %s938 = sld [smem:[#allocation4 + $0x10]]
        %v939 = vstv %s938
        %v940 = vmul.f32 %v939, %v913
        %v941 = vmul.f32 %v939, %v914
        %v942 = vmul.f32 %v939, %v915
        %v943 = vmul.f32 %v939, %v916
        %v944 = vmul.f32 %v939, %v917
        %v945 = vmul.f32 %v939, %v918
        %v946 = vmul.f32 %v939, %v919
        %v947 = vmul.f32 %v939, %v920
        %956 = vrot.lane.b32.xlu0 %v940, 126
        %v957 = vpop.permute.xlu0 %956
        %958 = vrot.lane.b32.xlu0 %v941, 126
        %v959 = vpop.permute.xlu0 %958
        %960 = vrot.lane.b32.xlu0 %v942, 126
        %v961 = vpop.permute.xlu0 %960
        %962 = vrot.lane.b32.xlu0 %v943, 126
        %v963 = vpop.permute.xlu0 %962
        %964 = vrot.lane.b32.xlu0 %v944, 126
        %v965 = vpop.permute.xlu0 %964
        %966 = vrot.lane.b32.xlu0 %v945, 126
        %v967 = vpop.permute.xlu0 %966
        %968 = vrot.lane.b32.xlu0 %v946, 126
        %v969 = vpop.permute.xlu0 %968
        %970 = vrot.lane.b32.xlu0 %v947, 126
        %v971 = vpop.permute.xlu0 %970
        %v980 = vadd.f32 %v930, %v957
        %v981 = vadd.f32 %v931, %v959
        %v982 = vadd.f32 %v932, %v961
        %v983 = vadd.f32 %v933, %v963
        %v984 = vadd.f32 %v934, %v965
        %v985 = vadd.f32 %v935, %v967
        %v986 = vadd.f32 %v936, %v969
        %v987 = vadd.f32 %v937, %v971
        %s988 = sld [smem:[#allocation4 + $0x11]]
        %v989 = vstv %s988
        %v990 = vmul.f32 %v989, %v913
        %v991 = vmul.f32 %v989, %v914
        %v992 = vmul.f32 %v989, %v915
        %v993 = vmul.f32 %v989, %v916
        %v994 = vmul.f32 %v989, %v917
        %v995 = vmul.f32 %v989, %v918
        %v996 = vmul.f32 %v989, %v919
        %v997 = vmul.f32 %v989, %v920
        %1006 = vrot.lane.b32.xlu0 %v990, 124
        %v1007 = vpop.permute.xlu0 %1006
        %1008 = vrot.lane.b32.xlu0 %v991, 124
        %v1009 = vpop.permute.xlu0 %1008
        %1010 = vrot.lane.b32.xlu0 %v992, 124
        %v1011 = vpop.permute.xlu0 %1010
        %1012 = vrot.lane.b32.xlu0 %v993, 124
        %v1013 = vpop.permute.xlu0 %1012
        %1014 = vrot.lane.b32.xlu0 %v994, 124
        %v1015 = vpop.permute.xlu0 %1014
        %1016 = vrot.lane.b32.xlu0 %v995, 124
        %v1017 = vpop.permute.xlu0 %1016
        %1018 = vrot.lane.b32.xlu0 %v996, 124
        %v1019 = vpop.permute.xlu0 %1018
        %1020 = vrot.lane.b32.xlu0 %v997, 124
        %v1021 = vpop.permute.xlu0 %1020
        %v1030 = vadd.f32 %v980, %v1007
        %v1031 = vadd.f32 %v981, %v1009
        %v1032 = vadd.f32 %v982, %v1011
        %v1033 = vadd.f32 %v983, %v1013
        %v1034 = vadd.f32 %v984, %v1015
        %v1035 = vadd.f32 %v985, %v1017
        %v1036 = vadd.f32 %v986, %v1019
        %v1037 = vadd.f32 %v987, %v1021
        %1046 = vrot.lane.b32.xlu0 %v1030, 2
        %v1047 = vpop.permute.xlu0 %1046
        %1048 = vrot.lane.b32.xlu0 %v1031, 2
        %v1049 = vpop.permute.xlu0 %1048
        %1050 = vrot.lane.b32.xlu0 %v1032, 2
        %v1051 = vpop.permute.xlu0 %1050
        %1052 = vrot.lane.b32.xlu0 %v1033, 2
        %v1053 = vpop.permute.xlu0 %1052
        %1054 = vrot.lane.b32.xlu0 %v1034, 2
        %v1055 = vpop.permute.xlu0 %1054
        %1056 = vrot.lane.b32.xlu0 %v1035, 2
        %v1057 = vpop.permute.xlu0 %1056
        %1058 = vrot.lane.b32.xlu0 %v1036, 2
        %v1059 = vpop.permute.xlu0 %1058
        %1060 = vrot.lane.b32.xlu0 %v1037, 2
        %v1061 = vpop.permute.xlu0 %1060
        %1070 = vst.msk [vmem:[#allocation2 + $0x4] sm:$0xff] %vm233, %v1047
        %1071 = vst.msk [vmem:[#allocation2 + $0xc] sm:$0xff] %vm233, %v1049
        %1072 = vst.msk [vmem:[#allocation2 + $0x14] sm:$0xff] %vm233, %v1051
        %1073 = vst.msk [vmem:[#allocation2 + $0x1c] sm:$0xff] %vm233, %v1053
        %1074 = vst.msk [vmem:[#allocation2 + $0x24] sm:$0xff] %vm233, %v1055
        %1075 = vst.msk [vmem:[#allocation2 + $0x2c] sm:$0xff] %vm233, %v1057
        %1076 = vst.msk [vmem:[#allocation2 + $0x34] sm:$0xff] %vm233, %v1059
        %1077 = vst.msk [vmem:[#allocation2 + $0x3c] sm:$0xff] %vm233, %v1061
        %s1078 = sld [smem:[#allocation4 + $0x12]]
        %v1079 = vld [vmem:[#allocation2 + $0x2] sm:$0xff]
        %v1080 = vld [vmem:[#allocation2 + $0xa] sm:$0xff]
        %v1081 = vld [vmem:[#allocation2 + $0x12] sm:$0xff]
        %v1082 = vld [vmem:[#allocation2 + $0x1a] sm:$0xff]
        %v1083 = vld [vmem:[#allocation2 + $0x22] sm:$0xff]
        %v1084 = vld [vmem:[#allocation2 + $0x2a] sm:$0xff]
        %v1085 = vld [vmem:[#allocation2 + $0x32] sm:$0xff]
        %v1086 = vld [vmem:[#allocation2 + $0x3a] sm:$0xff]
        %v1087 = vstv %s1078
        %v1088 = vmul.f32 %v1087, %v1079
        %v1089 = vmul.f32 %v1087, %v1080
        %v1090 = vmul.f32 %v1087, %v1081
        %v1091 = vmul.f32 %v1087, %v1082
        %v1092 = vmul.f32 %v1087, %v1083
        %v1093 = vmul.f32 %v1087, %v1084
        %v1094 = vmul.f32 %v1087, %v1085
        %v1095 = vmul.f32 %v1087, %v1086
        %v1096 = vadd.f32 %v1088, 0.0
        %v1097 = vadd.f32 %v1089, 0.0
        %v1098 = vadd.f32 %v1090, 0.0
        %v1099 = vadd.f32 %v1091, 0.0
        %v1100 = vadd.f32 %v1092, 0.0
        %v1101 = vadd.f32 %v1093, 0.0
        %v1102 = vadd.f32 %v1094, 0.0
        %v1103 = vadd.f32 %v1095, 0.0
        %s1104 = sld [smem:[#allocation4 + $0x13]]
        %v1105 = vstv %s1104
        %v1106 = vmul.f32 %v1105, %v1079
        %v1107 = vmul.f32 %v1105, %v1080
        %v1108 = vmul.f32 %v1105, %v1081
        %v1109 = vmul.f32 %v1105, %v1082
        %v1110 = vmul.f32 %v1105, %v1083
        %v1111 = vmul.f32 %v1105, %v1084
        %v1112 = vmul.f32 %v1105, %v1085
        %v1113 = vmul.f32 %v1105, %v1086
        %1122 = vrot.lane.b32.xlu0 %v1106, 126
        %v1123 = vpop.permute.xlu0 %1122
        %1124 = vrot.lane.b32.xlu0 %v1107, 126
        %v1125 = vpop.permute.xlu0 %1124
        %1126 = vrot.lane.b32.xlu0 %v1108, 126
        %v1127 = vpop.permute.xlu0 %1126
        %1128 = vrot.lane.b32.xlu0 %v1109, 126
        %v1129 = vpop.permute.xlu0 %1128
        %1130 = vrot.lane.b32.xlu0 %v1110, 126
        %v1131 = vpop.permute.xlu0 %1130
        %1132 = vrot.lane.b32.xlu0 %v1111, 126
        %v1133 = vpop.permute.xlu0 %1132
        %1134 = vrot.lane.b32.xlu0 %v1112, 126
        %v1135 = vpop.permute.xlu0 %1134
        %1136 = vrot.lane.b32.xlu0 %v1113, 126
        %v1137 = vpop.permute.xlu0 %1136
        %v1146 = vadd.f32 %v1096, %v1123
        %v1147 = vadd.f32 %v1097, %v1125
        %v1148 = vadd.f32 %v1098, %v1127
        %v1149 = vadd.f32 %v1099, %v1129
        %v1150 = vadd.f32 %v1100, %v1131
        %v1151 = vadd.f32 %v1101, %v1133
        %v1152 = vadd.f32 %v1102, %v1135
        %v1153 = vadd.f32 %v1103, %v1137
        %s1154 = sld [smem:[#allocation4 + $0x14]]
        %v1155 = vstv %s1154
        %v1156 = vmul.f32 %v1155, %v1079
        %v1157 = vmul.f32 %v1155, %v1080
        %v1158 = vmul.f32 %v1155, %v1081
        %v1159 = vmul.f32 %v1155, %v1082
        %v1160 = vmul.f32 %v1155, %v1083
        %v1161 = vmul.f32 %v1155, %v1084
        %v1162 = vmul.f32 %v1155, %v1085
        %v1163 = vmul.f32 %v1155, %v1086
        %1172 = vrot.lane.b32.xlu0 %v1156, 124
        %v1173 = vpop.permute.xlu0 %1172
        %1174 = vrot.lane.b32.xlu0 %v1157, 124
        %v1175 = vpop.permute.xlu0 %1174
        %1176 = vrot.lane.b32.xlu0 %v1158, 124
        %v1177 = vpop.permute.xlu0 %1176
        %1178 = vrot.lane.b32.xlu0 %v1159, 124
        %v1179 = vpop.permute.xlu0 %1178
        %1180 = vrot.lane.b32.xlu0 %v1160, 124
        %v1181 = vpop.permute.xlu0 %1180
        %1182 = vrot.lane.b32.xlu0 %v1161, 124
        %v1183 = vpop.permute.xlu0 %1182
        %1184 = vrot.lane.b32.xlu0 %v1162, 124
        %v1185 = vpop.permute.xlu0 %1184
        %1186 = vrot.lane.b32.xlu0 %v1163, 124
        %v1187 = vpop.permute.xlu0 %1186
        %v1196 = vadd.f32 %v1146, %v1173
        %v1197 = vadd.f32 %v1147, %v1175
        %v1198 = vadd.f32 %v1148, %v1177
        %v1199 = vadd.f32 %v1149, %v1179
        %v1200 = vadd.f32 %v1150, %v1181
        %v1201 = vadd.f32 %v1151, %v1183
        %v1202 = vadd.f32 %v1152, %v1185
        %v1203 = vadd.f32 %v1153, %v1187
        %s1204 = sld [smem:[#allocation4 + $0x15]]
        %v1205 = vld [vmem:[#allocation2 + $0x4] sm:$0xff]
        %v1206 = vld [vmem:[#allocation2 + $0xc] sm:$0xff]
        %v1207 = vld [vmem:[#allocation2 + $0x14] sm:$0xff]
        %v1208 = vld [vmem:[#allocation2 + $0x1c] sm:$0xff]
        %v1209 = vld [vmem:[#allocation2 + $0x24] sm:$0xff]
        %v1210 = vld [vmem:[#allocation2 + $0x2c] sm:$0xff]
        %v1211 = vld [vmem:[#allocation2 + $0x34] sm:$0xff]
        %v1212 = vld [vmem:[#allocation2 + $0x3c] sm:$0xff]
        %v1213 = vstv %s1204
        %v1214 = vmul.f32 %v1213, %v1205
        %v1215 = vmul.f32 %v1213, %v1206
        %v1216 = vmul.f32 %v1213, %v1207
        %v1217 = vmul.f32 %v1213, %v1208
        %v1218 = vmul.f32 %v1213, %v1209
        %v1219 = vmul.f32 %v1213, %v1210
        %v1220 = vmul.f32 %v1213, %v1211
        %v1221 = vmul.f32 %v1213, %v1212
        %v1222 = vadd.f32 %v1196, %v1214
        %v1223 = vadd.f32 %v1197, %v1215
        %v1224 = vadd.f32 %v1198, %v1216
        %v1225 = vadd.f32 %v1199, %v1217
        %v1226 = vadd.f32 %v1200, %v1218
        %v1227 = vadd.f32 %v1201, %v1219
        %v1228 = vadd.f32 %v1202, %v1220
        %v1229 = vadd.f32 %v1203, %v1221
        %s1230 = sld [smem:[#allocation4 + $0x16]]
        %v1231 = vstv %s1230
        %v1232 = vmul.f32 %v1231, %v1205
        %v1233 = vmul.f32 %v1231, %v1206
        %v1234 = vmul.f32 %v1231, %v1207
        %v1235 = vmul.f32 %v1231, %v1208
        %v1236 = vmul.f32 %v1231, %v1209
        %v1237 = vmul.f32 %v1231, %v1210
        %v1238 = vmul.f32 %v1231, %v1211
        %v1239 = vmul.f32 %v1231, %v1212
        %1248 = vrot.lane.b32.xlu0 %v1232, 126
        %v1249 = vpop.permute.xlu0 %1248
        %1250 = vrot.lane.b32.xlu0 %v1233, 126
        %v1251 = vpop.permute.xlu0 %1250
        %1252 = vrot.lane.b32.xlu0 %v1234, 126
        %v1253 = vpop.permute.xlu0 %1252
        %1254 = vrot.lane.b32.xlu0 %v1235, 126
        %v1255 = vpop.permute.xlu0 %1254
        %1256 = vrot.lane.b32.xlu0 %v1236, 126
        %v1257 = vpop.permute.xlu0 %1256
        %1258 = vrot.lane.b32.xlu0 %v1237, 126
        %v1259 = vpop.permute.xlu0 %1258
        %1260 = vrot.lane.b32.xlu0 %v1238, 126
        %v1261 = vpop.permute.xlu0 %1260
        %1262 = vrot.lane.b32.xlu0 %v1239, 126
        %v1263 = vpop.permute.xlu0 %1262
        %v1272 = vadd.f32 %v1222, %v1249
        %v1273 = vadd.f32 %v1223, %v1251
        %v1274 = vadd.f32 %v1224, %v1253
        %v1275 = vadd.f32 %v1225, %v1255
        %v1276 = vadd.f32 %v1226, %v1257
        %v1277 = vadd.f32 %v1227, %v1259
        %v1278 = vadd.f32 %v1228, %v1261
        %v1279 = vadd.f32 %v1229, %v1263
        %s1280 = sld [smem:[#allocation4 + $0x17]]
        %v1281 = vstv %s1280
        %v1282 = vmul.f32 %v1281, %v1205
        %v1283 = vmul.f32 %v1281, %v1206
        %v1284 = vmul.f32 %v1281, %v1207
        %v1285 = vmul.f32 %v1281, %v1208
        %v1286 = vmul.f32 %v1281, %v1209
        %v1287 = vmul.f32 %v1281, %v1210
        %v1288 = vmul.f32 %v1281, %v1211
        %v1289 = vmul.f32 %v1281, %v1212
        %1298 = vrot.lane.b32.xlu0 %v1282, 124
        %v1299 = vpop.permute.xlu0 %1298
        %1300 = vrot.lane.b32.xlu0 %v1283, 124
        %v1301 = vpop.permute.xlu0 %1300
        %1302 = vrot.lane.b32.xlu0 %v1284, 124
        %v1303 = vpop.permute.xlu0 %1302
        %1304 = vrot.lane.b32.xlu0 %v1285, 124
        %v1305 = vpop.permute.xlu0 %1304
        %1306 = vrot.lane.b32.xlu0 %v1286, 124
        %v1307 = vpop.permute.xlu0 %1306
        %1308 = vrot.lane.b32.xlu0 %v1287, 124
        %v1309 = vpop.permute.xlu0 %1308
        %1310 = vrot.lane.b32.xlu0 %v1288, 124
        %v1311 = vpop.permute.xlu0 %1310
        %1312 = vrot.lane.b32.xlu0 %v1289, 124
        %v1313 = vpop.permute.xlu0 %1312
        %v1322 = vadd.f32 %v1272, %v1299
        %v1323 = vadd.f32 %v1273, %v1301
        %v1324 = vadd.f32 %v1274, %v1303
        %v1325 = vadd.f32 %v1275, %v1305
        %v1326 = vadd.f32 %v1276, %v1307
        %v1327 = vadd.f32 %v1277, %v1309
        %v1328 = vadd.f32 %v1278, %v1311
        %v1329 = vadd.f32 %v1279, %v1313
        %s1330 = sld [smem:[#allocation4 + $0x18]]
        %v1331 = vld [vmem:[#allocation2 + $0x6] sm:$0xff]
        %v1332 = vld [vmem:[#allocation2 + $0xe] sm:$0xff]
        %v1333 = vld [vmem:[#allocation2 + $0x16] sm:$0xff]
        %v1334 = vld [vmem:[#allocation2 + $0x1e] sm:$0xff]
        %v1335 = vld [vmem:[#allocation2 + $0x26] sm:$0xff]
        %v1336 = vld [vmem:[#allocation2 + $0x2e] sm:$0xff]
        %v1337 = vld [vmem:[#allocation2 + $0x36] sm:$0xff]
        %v1338 = vld [vmem:[#allocation2 + $0x3e] sm:$0xff]
        %v1339 = vstv %s1330
        %v1340 = vmul.f32 %v1339, %v1331
        %v1341 = vmul.f32 %v1339, %v1332
        %v1342 = vmul.f32 %v1339, %v1333
        %v1343 = vmul.f32 %v1339, %v1334
        %v1344 = vmul.f32 %v1339, %v1335
        %v1345 = vmul.f32 %v1339, %v1336
        %v1346 = vmul.f32 %v1339, %v1337
        %v1347 = vmul.f32 %v1339, %v1338
        %v1348 = vadd.f32 %v1322, %v1340
        %v1349 = vadd.f32 %v1323, %v1341
        %v1350 = vadd.f32 %v1324, %v1342
        %v1351 = vadd.f32 %v1325, %v1343
        %v1352 = vadd.f32 %v1326, %v1344
        %v1353 = vadd.f32 %v1327, %v1345
        %v1354 = vadd.f32 %v1328, %v1346
        %v1355 = vadd.f32 %v1329, %v1347
        %s1356 = sld [smem:[#allocation4 + $0x19]]
        %v1357 = vstv %s1356
        %v1358 = vmul.f32 %v1357, %v1331
        %v1359 = vmul.f32 %v1357, %v1332
        %v1360 = vmul.f32 %v1357, %v1333
        %v1361 = vmul.f32 %v1357, %v1334
        %v1362 = vmul.f32 %v1357, %v1335
        %v1363 = vmul.f32 %v1357, %v1336
        %v1364 = vmul.f32 %v1357, %v1337
        %v1365 = vmul.f32 %v1357, %v1338
        %1374 = vrot.lane.b32.xlu0 %v1358, 126
        %v1375 = vpop.permute.xlu0 %1374
        %1376 = vrot.lane.b32.xlu0 %v1359, 126
        %v1377 = vpop.permute.xlu0 %1376
        %1378 = vrot.lane.b32.xlu0 %v1360, 126
        %v1379 = vpop.permute.xlu0 %1378
        %1380 = vrot.lane.b32.xlu0 %v1361, 126
        %v1381 = vpop.permute.xlu0 %1380
        %1382 = vrot.lane.b32.xlu0 %v1362, 126
        %v1383 = vpop.permute.xlu0 %1382
        %1384 = vrot.lane.b32.xlu0 %v1363, 126
        %v1385 = vpop.permute.xlu0 %1384
        %1386 = vrot.lane.b32.xlu0 %v1364, 126
        %v1387 = vpop.permute.xlu0 %1386
        %1388 = vrot.lane.b32.xlu0 %v1365, 126
        %v1389 = vpop.permute.xlu0 %1388
        %v1398 = vadd.f32 %v1348, %v1375
        %v1399 = vadd.f32 %v1349, %v1377
        %v1400 = vadd.f32 %v1350, %v1379
        %v1401 = vadd.f32 %v1351, %v1381
        %v1402 = vadd.f32 %v1352, %v1383
        %v1403 = vadd.f32 %v1353, %v1385
        %v1404 = vadd.f32 %v1354, %v1387
        %v1405 = vadd.f32 %v1355, %v1389
        %s1406 = sld [smem:[#allocation4 + $0x1a]]
        %v1407 = vstv %s1406
        %v1408 = vmul.f32 %v1407, %v1331
        %v1409 = vmul.f32 %v1407, %v1332
        %v1410 = vmul.f32 %v1407, %v1333
        %v1411 = vmul.f32 %v1407, %v1334
        %v1412 = vmul.f32 %v1407, %v1335
        %v1413 = vmul.f32 %v1407, %v1336
        %v1414 = vmul.f32 %v1407, %v1337
        %v1415 = vmul.f32 %v1407, %v1338
        %1424 = vrot.lane.b32.xlu0 %v1408, 124
        %v1425 = vpop.permute.xlu0 %1424
        %1426 = vrot.lane.b32.xlu0 %v1409, 124
        %v1427 = vpop.permute.xlu0 %1426
        %1428 = vrot.lane.b32.xlu0 %v1410, 124
        %v1429 = vpop.permute.xlu0 %1428
        %1430 = vrot.lane.b32.xlu0 %v1411, 124
        %v1431 = vpop.permute.xlu0 %1430
        %1432 = vrot.lane.b32.xlu0 %v1412, 124
        %v1433 = vpop.permute.xlu0 %1432
        %1434 = vrot.lane.b32.xlu0 %v1413, 124
        %v1435 = vpop.permute.xlu0 %1434
        %1436 = vrot.lane.b32.xlu0 %v1414, 124
        %v1437 = vpop.permute.xlu0 %1436
        %1438 = vrot.lane.b32.xlu0 %v1415, 124
        %v1439 = vpop.permute.xlu0 %1438
        %v1448 = vadd.f32 %v1398, %v1425
        %v1449 = vadd.f32 %v1399, %v1427
        %v1450 = vadd.f32 %v1400, %v1429
        %v1451 = vadd.f32 %v1401, %v1431
        %v1452 = vadd.f32 %v1402, %v1433
        %v1453 = vadd.f32 %v1403, %v1435
        %v1454 = vadd.f32 %v1404, %v1437
        %v1455 = vadd.f32 %v1405, %v1439
        %1464 = vrot.lane.b32.xlu0 %v1448, 2
        %v1465 = vpop.permute.xlu0 %1464
        %1466 = vrot.lane.b32.xlu0 %v1449, 2
        %v1467 = vpop.permute.xlu0 %1466
        %1468 = vrot.lane.b32.xlu0 %v1450, 2
        %v1469 = vpop.permute.xlu0 %1468
        %1470 = vrot.lane.b32.xlu0 %v1451, 2
        %v1471 = vpop.permute.xlu0 %1470
        %1472 = vrot.lane.b32.xlu0 %v1452, 2
        %v1473 = vpop.permute.xlu0 %1472
        %1474 = vrot.lane.b32.xlu0 %v1453, 2
        %v1475 = vpop.permute.xlu0 %1474
        %1476 = vrot.lane.b32.xlu0 %v1454, 2
        %v1477 = vpop.permute.xlu0 %1476
        %1478 = vrot.lane.b32.xlu0 %v1455, 2
        %v1479 = vpop.permute.xlu0 %1478
        %1488 = vst.msk [vmem:[#allocation3 + $0x4] sm:$0xff] %vm233, %v1465
        %1489 = vst.msk [vmem:[#allocation3 + $0xc] sm:$0xff] %vm233, %v1467
        %1490 = vst.msk [vmem:[#allocation3 + $0x14] sm:$0xff] %vm233, %v1469
        %1491 = vst.msk [vmem:[#allocation3 + $0x1c] sm:$0xff] %vm233, %v1471
        %1492 = vst.msk [vmem:[#allocation3 + $0x24] sm:$0xff] %vm233, %v1473
        %1493 = vst.msk [vmem:[#allocation3 + $0x2c] sm:$0xff] %vm233, %v1475
        %1494 = vst.msk [vmem:[#allocation3 + $0x34] sm:$0xff] %vm233, %v1477
        %1495 = vst.msk [vmem:[#allocation3 + $0x3c] sm:$0xff] %vm233, %v1479
        %s1496 = sld [smem:[#allocation4 + $0x1b]]
        %v1497 = vld [vmem:[#allocation3] sm:$0xff]
        %v1498 = vld [vmem:[#allocation3 + $0x8] sm:$0xff]
        %v1499 = vld [vmem:[#allocation3 + $0x10] sm:$0xff]
        %v1500 = vld [vmem:[#allocation3 + $0x18] sm:$0xff]
        %v1501 = vld [vmem:[#allocation3 + $0x20] sm:$0xff]
        %v1502 = vld [vmem:[#allocation3 + $0x28] sm:$0xff]
        %v1503 = vld [vmem:[#allocation3 + $0x30] sm:$0xff]
        %v1504 = vld [vmem:[#allocation3 + $0x38] sm:$0xff]
        %v1505 = vstv %s1496
        %v1506 = vmul.f32 %v1505, %v1497
        %v1507 = vmul.f32 %v1505, %v1498
        %v1508 = vmul.f32 %v1505, %v1499
        %v1509 = vmul.f32 %v1505, %v1500
        %v1510 = vmul.f32 %v1505, %v1501
        %v1511 = vmul.f32 %v1505, %v1502
        %v1512 = vmul.f32 %v1505, %v1503
        %v1513 = vmul.f32 %v1505, %v1504
        %v1514 = vadd.f32 %v1506, 0.0
        %v1515 = vadd.f32 %v1507, 0.0
        %v1516 = vadd.f32 %v1508, 0.0
        %v1517 = vadd.f32 %v1509, 0.0
        %v1518 = vadd.f32 %v1510, 0.0
        %v1519 = vadd.f32 %v1511, 0.0
        %v1520 = vadd.f32 %v1512, 0.0
        %v1521 = vadd.f32 %v1513, 0.0
        %s1522 = sld [smem:[#allocation4 + $0x1c]]
        %v1523 = vstv %s1522
        %v1524 = vmul.f32 %v1523, %v1497
        %v1525 = vmul.f32 %v1523, %v1498
        %v1526 = vmul.f32 %v1523, %v1499
        %v1527 = vmul.f32 %v1523, %v1500
        %v1528 = vmul.f32 %v1523, %v1501
        %v1529 = vmul.f32 %v1523, %v1502
        %v1530 = vmul.f32 %v1523, %v1503
        %v1531 = vmul.f32 %v1523, %v1504
        %1540 = vrot.lane.b32.xlu0 %v1524, 124
        %v1541 = vpop.permute.xlu0 %1540
        %1542 = vrot.lane.b32.xlu0 %v1525, 124
        %v1543 = vpop.permute.xlu0 %1542
        %1544 = vrot.lane.b32.xlu0 %v1526, 124
        %v1545 = vpop.permute.xlu0 %1544
        %1546 = vrot.lane.b32.xlu0 %v1527, 124
        %v1547 = vpop.permute.xlu0 %1546
        %1548 = vrot.lane.b32.xlu0 %v1528, 124
        %v1549 = vpop.permute.xlu0 %1548
        %1550 = vrot.lane.b32.xlu0 %v1529, 124
        %v1551 = vpop.permute.xlu0 %1550
        %1552 = vrot.lane.b32.xlu0 %v1530, 124
        %v1553 = vpop.permute.xlu0 %1552
        %1554 = vrot.lane.b32.xlu0 %v1531, 124
        %v1555 = vpop.permute.xlu0 %1554
        %v1564 = vadd.f32 %v1514, %v1541
        %v1565 = vadd.f32 %v1515, %v1543
        %v1566 = vadd.f32 %v1516, %v1545
        %v1567 = vadd.f32 %v1517, %v1547
        %v1568 = vadd.f32 %v1518, %v1549
        %v1569 = vadd.f32 %v1519, %v1551
        %v1570 = vadd.f32 %v1520, %v1553
        %v1571 = vadd.f32 %v1521, %v1555
        %s1572 = sld [smem:[#allocation4 + $0x1d]]
        %v1573 = vstv %s1572
        %v1574 = vmul.f32 %v1573, %v1497
        %v1575 = vmul.f32 %v1573, %v1498
        %v1576 = vmul.f32 %v1573, %v1499
        %v1577 = vmul.f32 %v1573, %v1500
        %v1578 = vmul.f32 %v1573, %v1501
        %v1579 = vmul.f32 %v1573, %v1502
        %v1580 = vmul.f32 %v1573, %v1503
        %v1581 = vmul.f32 %v1573, %v1504
        %1590 = vrot.lane.b32.xlu0 %v1574, 120
        %v1591 = vpop.permute.xlu0 %1590
        %1592 = vrot.lane.b32.xlu0 %v1575, 120
        %v1593 = vpop.permute.xlu0 %1592
        %1594 = vrot.lane.b32.xlu0 %v1576, 120
        %v1595 = vpop.permute.xlu0 %1594
        %1596 = vrot.lane.b32.xlu0 %v1577, 120
        %v1597 = vpop.permute.xlu0 %1596
        %1598 = vrot.lane.b32.xlu0 %v1578, 120
        %v1599 = vpop.permute.xlu0 %1598
        %1600 = vrot.lane.b32.xlu0 %v1579, 120
        %v1601 = vpop.permute.xlu0 %1600
        %1602 = vrot.lane.b32.xlu0 %v1580, 120
        %v1603 = vpop.permute.xlu0 %1602
        %1604 = vrot.lane.b32.xlu0 %v1581, 120
        %v1605 = vpop.permute.xlu0 %1604
        %v1614 = vadd.f32 %v1564, %v1591
        %v1615 = vadd.f32 %v1565, %v1593
        %v1616 = vadd.f32 %v1566, %v1595
        %v1617 = vadd.f32 %v1567, %v1597
        %v1618 = vadd.f32 %v1568, %v1599
        %v1619 = vadd.f32 %v1569, %v1601
        %v1620 = vadd.f32 %v1570, %v1603
        %v1621 = vadd.f32 %v1571, %v1605
        %s1622 = sld [smem:[#allocation4 + $0x1e]]
        %v1623 = vld [vmem:[#allocation3 + $0x4] sm:$0xff]
        %v1624 = vld [vmem:[#allocation3 + $0xc] sm:$0xff]
        %v1625 = vld [vmem:[#allocation3 + $0x14] sm:$0xff]
        %v1626 = vld [vmem:[#allocation3 + $0x1c] sm:$0xff]
        %v1627 = vld [vmem:[#allocation3 + $0x24] sm:$0xff]
        %v1628 = vld [vmem:[#allocation3 + $0x2c] sm:$0xff]
        %v1629 = vld [vmem:[#allocation3 + $0x34] sm:$0xff]
        %v1630 = vld [vmem:[#allocation3 + $0x3c] sm:$0xff]
        %v1631 = vstv %s1622
        %v1632 = vmul.f32 %v1631, %v1623
        %v1633 = vmul.f32 %v1631, %v1624
        %v1634 = vmul.f32 %v1631, %v1625
        %v1635 = vmul.f32 %v1631, %v1626
        %v1636 = vmul.f32 %v1631, %v1627
        %v1637 = vmul.f32 %v1631, %v1628
        %v1638 = vmul.f32 %v1631, %v1629
        %v1639 = vmul.f32 %v1631, %v1630
        %v1640 = vadd.f32 %v1614, %v1632
        %v1641 = vadd.f32 %v1615, %v1633
        %v1642 = vadd.f32 %v1616, %v1634
        %v1643 = vadd.f32 %v1617, %v1635
        %v1644 = vadd.f32 %v1618, %v1636
        %v1645 = vadd.f32 %v1619, %v1637
        %v1646 = vadd.f32 %v1620, %v1638
        %v1647 = vadd.f32 %v1621, %v1639
        %s1648 = sld [smem:[#allocation4 + $0x1f]]
        %v1649 = vstv %s1648
        %v1650 = vmul.f32 %v1649, %v1623
        %v1651 = vmul.f32 %v1649, %v1624
        %v1652 = vmul.f32 %v1649, %v1625
        %v1653 = vmul.f32 %v1649, %v1626
        %v1654 = vmul.f32 %v1649, %v1627
        %v1655 = vmul.f32 %v1649, %v1628
        %v1656 = vmul.f32 %v1649, %v1629
        %v1657 = vmul.f32 %v1649, %v1630
        %1666 = vrot.lane.b32.xlu0 %v1650, 124
        %v1667 = vpop.permute.xlu0 %1666
        %1668 = vrot.lane.b32.xlu0 %v1651, 124
        %v1669 = vpop.permute.xlu0 %1668
        %1670 = vrot.lane.b32.xlu0 %v1652, 124
        %v1671 = vpop.permute.xlu0 %1670
        %1672 = vrot.lane.b32.xlu0 %v1653, 124
        %v1673 = vpop.permute.xlu0 %1672
        %1674 = vrot.lane.b32.xlu0 %v1654, 124
        %v1675 = vpop.permute.xlu0 %1674
        %1676 = vrot.lane.b32.xlu0 %v1655, 124
        %v1677 = vpop.permute.xlu0 %1676
        %1678 = vrot.lane.b32.xlu0 %v1656, 124
        %v1679 = vpop.permute.xlu0 %1678
        %1680 = vrot.lane.b32.xlu0 %v1657, 124
        %v1681 = vpop.permute.xlu0 %1680
        %v1690 = vadd.f32 %v1640, %v1667
        %v1691 = vadd.f32 %v1641, %v1669
        %v1692 = vadd.f32 %v1642, %v1671
        %v1693 = vadd.f32 %v1643, %v1673
        %v1694 = vadd.f32 %v1644, %v1675
        %v1695 = vadd.f32 %v1645, %v1677
        %v1696 = vadd.f32 %v1646, %v1679
        %v1697 = vadd.f32 %v1647, %v1681
        %s1698 = sld [smem:[#allocation4 + $0x20]]
        %v1699 = vstv %s1698
        %v1700 = vmul.f32 %v1699, %v1623
        %v1701 = vmul.f32 %v1699, %v1624
        %v1702 = vmul.f32 %v1699, %v1625
        %v1703 = vmul.f32 %v1699, %v1626
        %v1704 = vmul.f32 %v1699, %v1627
        %v1705 = vmul.f32 %v1699, %v1628
        %v1706 = vmul.f32 %v1699, %v1629
        %v1707 = vmul.f32 %v1699, %v1630
        %1716 = vrot.lane.b32.xlu0 %v1700, 120
        %v1717 = vpop.permute.xlu0 %1716
        %1718 = vrot.lane.b32.xlu0 %v1701, 120
        %v1719 = vpop.permute.xlu0 %1718
        %1720 = vrot.lane.b32.xlu0 %v1702, 120
        %v1721 = vpop.permute.xlu0 %1720
        %1722 = vrot.lane.b32.xlu0 %v1703, 120
        %v1723 = vpop.permute.xlu0 %1722
        %1724 = vrot.lane.b32.xlu0 %v1704, 120
        %v1725 = vpop.permute.xlu0 %1724
        %1726 = vrot.lane.b32.xlu0 %v1705, 120
        %v1727 = vpop.permute.xlu0 %1726
        %1728 = vrot.lane.b32.xlu0 %v1706, 120
        %v1729 = vpop.permute.xlu0 %1728
        %1730 = vrot.lane.b32.xlu0 %v1707, 120
        %v1731 = vpop.permute.xlu0 %1730
        %v1740 = vadd.f32 %v1690, %v1717
        %v1741 = vadd.f32 %v1691, %v1719
        %v1742 = vadd.f32 %v1692, %v1721
        %v1743 = vadd.f32 %v1693, %v1723
        %v1744 = vadd.f32 %v1694, %v1725
        %v1745 = vadd.f32 %v1695, %v1727
        %v1746 = vadd.f32 %v1696, %v1729
        %v1747 = vadd.f32 %v1697, %v1731
        %s1748 = sld [smem:[#allocation4 + $0x21]]
        %v1749 = vld [vmem:[#allocation3 + $0x8] sm:$0xff]
        %v1750 = vld [vmem:[#allocation3 + $0x10] sm:$0xff]
        %v1751 = vld [vmem:[#allocation3 + $0x18] sm:$0xff]
        %v1752 = vld [vmem:[#allocation3 + $0x20] sm:$0xff]
        %v1753 = vld [vmem:[#allocation3 + $0x28] sm:$0xff]
        %v1754 = vld [vmem:[#allocation3 + $0x30] sm:$0xff]
        %v1755 = vld [vmem:[#allocation3 + $0x38] sm:$0xff]
        %v1756 = vld [vmem:[#allocation3 + $0x40] sm:$0xff]
        %v1757 = vstv %s1748
        %v1758 = vmul.f32 %v1757, %v1749
        %v1759 = vmul.f32 %v1757, %v1750
        %v1760 = vmul.f32 %v1757, %v1751
        %v1761 = vmul.f32 %v1757, %v1752
        %v1762 = vmul.f32 %v1757, %v1753
        %v1763 = vmul.f32 %v1757, %v1754
        %v1764 = vmul.f32 %v1757, %v1755
        %v1765 = vmul.f32 %v1757, %v1756
        %v1766 = vadd.f32 %v1740, %v1758
        %v1767 = vadd.f32 %v1741, %v1759
        %v1768 = vadd.f32 %v1742, %v1760
        %v1769 = vadd.f32 %v1743, %v1761
        %v1770 = vadd.f32 %v1744, %v1762
        %v1771 = vadd.f32 %v1745, %v1763
        %v1772 = vadd.f32 %v1746, %v1764
        %v1773 = vadd.f32 %v1747, %v1765
        %s1774 = sld [smem:[#allocation4 + $0x22]]
        %v1775 = vstv %s1774
        %v1776 = vmul.f32 %v1775, %v1749
        %v1777 = vmul.f32 %v1775, %v1750
        %v1778 = vmul.f32 %v1775, %v1751
        %v1779 = vmul.f32 %v1775, %v1752
        %v1780 = vmul.f32 %v1775, %v1753
        %v1781 = vmul.f32 %v1775, %v1754
        %v1782 = vmul.f32 %v1775, %v1755
        %v1783 = vmul.f32 %v1775, %v1756
        %1792 = vrot.lane.b32.xlu0 %v1776, 124
        %v1793 = vpop.permute.xlu0 %1792
        %1794 = vrot.lane.b32.xlu0 %v1777, 124
        %v1795 = vpop.permute.xlu0 %1794
        %1796 = vrot.lane.b32.xlu0 %v1778, 124
        %v1797 = vpop.permute.xlu0 %1796
        %1798 = vrot.lane.b32.xlu0 %v1779, 124
        %v1799 = vpop.permute.xlu0 %1798
        %1800 = vrot.lane.b32.xlu0 %v1780, 124
        %v1801 = vpop.permute.xlu0 %1800
        %1802 = vrot.lane.b32.xlu0 %v1781, 124
        %v1803 = vpop.permute.xlu0 %1802
        %1804 = vrot.lane.b32.xlu0 %v1782, 124
        %v1805 = vpop.permute.xlu0 %1804
        %1806 = vrot.lane.b32.xlu0 %v1783, 124
        %v1807 = vpop.permute.xlu0 %1806
        %v1816 = vadd.f32 %v1766, %v1793
        %v1817 = vadd.f32 %v1767, %v1795
        %v1818 = vadd.f32 %v1768, %v1797
        %v1819 = vadd.f32 %v1769, %v1799
        %v1820 = vadd.f32 %v1770, %v1801
        %v1821 = vadd.f32 %v1771, %v1803
        %v1822 = vadd.f32 %v1772, %v1805
        %v1823 = vadd.f32 %v1773, %v1807
        %s1824 = sld [smem:[#allocation4 + $0x23]]
        %v1825 = vstv %s1824
        %v1826 = vmul.f32 %v1825, %v1749
        %v1827 = vmul.f32 %v1825, %v1750
        %v1828 = vmul.f32 %v1825, %v1751
        %v1829 = vmul.f32 %v1825, %v1752
        %v1830 = vmul.f32 %v1825, %v1753
        %v1831 = vmul.f32 %v1825, %v1754
        %v1832 = vmul.f32 %v1825, %v1755
        %v1833 = vmul.f32 %v1825, %v1756
        %1842 = vrot.lane.b32.xlu0 %v1826, 120
        %v1843 = vpop.permute.xlu0 %1842
        %1844 = vrot.lane.b32.xlu0 %v1827, 120
        %v1845 = vpop.permute.xlu0 %1844
        %1846 = vrot.lane.b32.xlu0 %v1828, 120
        %v1847 = vpop.permute.xlu0 %1846
        %1848 = vrot.lane.b32.xlu0 %v1829, 120
        %v1849 = vpop.permute.xlu0 %1848
        %1850 = vrot.lane.b32.xlu0 %v1830, 120
        %v1851 = vpop.permute.xlu0 %1850
        %1852 = vrot.lane.b32.xlu0 %v1831, 120
        %v1853 = vpop.permute.xlu0 %1852
        %1854 = vrot.lane.b32.xlu0 %v1832, 120
        %v1855 = vpop.permute.xlu0 %1854
        %1856 = vrot.lane.b32.xlu0 %v1833, 120
        %v1857 = vpop.permute.xlu0 %1856
        %v1866 = vadd.f32 %v1816, %v1843
        %v1867 = vadd.f32 %v1817, %v1845
        %v1868 = vadd.f32 %v1818, %v1847
        %v1869 = vadd.f32 %v1819, %v1849
        %v1870 = vadd.f32 %v1820, %v1851
        %v1871 = vadd.f32 %v1821, %v1853
        %v1872 = vadd.f32 %v1822, %v1855
        %v1873 = vadd.f32 %v1823, %v1857
        %1882 = vrot.lane.b32.xlu0 %v1866, 4
        %v1883 = vpop.permute.xlu0 %1882
        %1884 = vrot.lane.b32.xlu0 %v1867, 4
        %v1885 = vpop.permute.xlu0 %1884
        %1886 = vrot.lane.b32.xlu0 %v1868, 4
        %v1887 = vpop.permute.xlu0 %1886
        %1888 = vrot.lane.b32.xlu0 %v1869, 4
        %v1889 = vpop.permute.xlu0 %1888
        %1890 = vrot.lane.b32.xlu0 %v1870, 4
        %v1891 = vpop.permute.xlu0 %1890
        %1892 = vrot.lane.b32.xlu0 %v1871, 4
        %v1893 = vpop.permute.xlu0 %1892
        %1894 = vrot.lane.b32.xlu0 %v1872, 4
        %v1895 = vpop.permute.xlu0 %1894
        %1896 = vrot.lane.b32.xlu0 %v1873, 4
        %v1897 = vpop.permute.xlu0 %1896
        %1906 = vst.msk [vmem:[#allocation2 + $0x4] sm:$0xff] %vm233, %v1883
        %1907 = vst.msk [vmem:[#allocation2 + $0xc] sm:$0xff] %vm233, %v1885
        %1908 = vst.msk [vmem:[#allocation2 + $0x14] sm:$0xff] %vm233, %v1887
        %1909 = vst.msk [vmem:[#allocation2 + $0x1c] sm:$0xff] %vm233, %v1889
        %1910 = vst.msk [vmem:[#allocation2 + $0x24] sm:$0xff] %vm233, %v1891
        %1911 = vst.msk [vmem:[#allocation2 + $0x2c] sm:$0xff] %vm233, %v1893
        %1912 = vst.msk [vmem:[#allocation2 + $0x34] sm:$0xff] %vm233, %v1895
        %1913 = vst.msk [vmem:[#allocation2 + $0x3c] sm:$0xff] %vm233, %v1897
        %s1914 = sld [smem:[#allocation4 + $0x24]]
        %v1915 = vld [vmem:[#allocation2] sm:$0xff]
        %v1916 = vld [vmem:[#allocation2 + $0x8] sm:$0xff]
        %v1917 = vld [vmem:[#allocation2 + $0x10] sm:$0xff]
        %v1918 = vld [vmem:[#allocation2 + $0x18] sm:$0xff]
        %v1919 = vld [vmem:[#allocation2 + $0x20] sm:$0xff]
        %v1920 = vld [vmem:[#allocation2 + $0x28] sm:$0xff]
        %v1921 = vld [vmem:[#allocation2 + $0x30] sm:$0xff]
        %v1922 = vld [vmem:[#allocation2 + $0x38] sm:$0xff]
        %v1923 = vstv %s1914
        %v1924 = vmul.f32 %v1923, %v1915
        %v1925 = vmul.f32 %v1923, %v1916
        %v1926 = vmul.f32 %v1923, %v1917
        %v1927 = vmul.f32 %v1923, %v1918
        %v1928 = vmul.f32 %v1923, %v1919
        %v1929 = vmul.f32 %v1923, %v1920
        %v1930 = vmul.f32 %v1923, %v1921
        %v1931 = vmul.f32 %v1923, %v1922
        %v1932 = vadd.f32 %v1924, 0.0
        %v1933 = vadd.f32 %v1925, 0.0
        %v1934 = vadd.f32 %v1926, 0.0
        %v1935 = vadd.f32 %v1927, 0.0
        %v1936 = vadd.f32 %v1928, 0.0
        %v1937 = vadd.f32 %v1929, 0.0
        %v1938 = vadd.f32 %v1930, 0.0
        %v1939 = vadd.f32 %v1931, 0.0
        %s1940 = sld [smem:[#allocation4 + $0x25]]
        %v1941 = vstv %s1940
        %v1942 = vmul.f32 %v1941, %v1915
        %v1943 = vmul.f32 %v1941, %v1916
        %v1944 = vmul.f32 %v1941, %v1917
        %v1945 = vmul.f32 %v1941, %v1918
        %v1946 = vmul.f32 %v1941, %v1919
        %v1947 = vmul.f32 %v1941, %v1920
        %v1948 = vmul.f32 %v1941, %v1921
        %v1949 = vmul.f32 %v1941, %v1922
        %1958 = vrot.lane.b32.xlu0 %v1942, 124
        %v1959 = vpop.permute.xlu0 %1958
        %1960 = vrot.lane.b32.xlu0 %v1943, 124
        %v1961 = vpop.permute.xlu0 %1960
        %1962 = vrot.lane.b32.xlu0 %v1944, 124
        %v1963 = vpop.permute.xlu0 %1962
        %1964 = vrot.lane.b32.xlu0 %v1945, 124
        %v1965 = vpop.permute.xlu0 %1964
        %1966 = vrot.lane.b32.xlu0 %v1946, 124
        %v1967 = vpop.permute.xlu0 %1966
        %1968 = vrot.lane.b32.xlu0 %v1947, 124
        %v1969 = vpop.permute.xlu0 %1968
        %1970 = vrot.lane.b32.xlu0 %v1948, 124
        %v1971 = vpop.permute.xlu0 %1970
        %1972 = vrot.lane.b32.xlu0 %v1949, 124
        %v1973 = vpop.permute.xlu0 %1972
        %v1982 = vadd.f32 %v1932, %v1959
        %v1983 = vadd.f32 %v1933, %v1961
        %v1984 = vadd.f32 %v1934, %v1963
        %v1985 = vadd.f32 %v1935, %v1965
        %v1986 = vadd.f32 %v1936, %v1967
        %v1987 = vadd.f32 %v1937, %v1969
        %v1988 = vadd.f32 %v1938, %v1971
        %v1989 = vadd.f32 %v1939, %v1973
        %s1990 = sld [smem:[#allocation4 + $0x26]]
        %v1991 = vstv %s1990
        %v1992 = vmul.f32 %v1991, %v1915
        %v1993 = vmul.f32 %v1991, %v1916
        %v1994 = vmul.f32 %v1991, %v1917
        %v1995 = vmul.f32 %v1991, %v1918
        %v1996 = vmul.f32 %v1991, %v1919
        %v1997 = vmul.f32 %v1991, %v1920
        %v1998 = vmul.f32 %v1991, %v1921
        %v1999 = vmul.f32 %v1991, %v1922
        %2008 = vrot.lane.b32.xlu0 %v1992, 120
        %v2009 = vpop.permute.xlu0 %2008
        %2010 = vrot.lane.b32.xlu0 %v1993, 120
        %v2011 = vpop.permute.xlu0 %2010
        %2012 = vrot.lane.b32.xlu0 %v1994, 120
        %v2013 = vpop.permute.xlu0 %2012
        %2014 = vrot.lane.b32.xlu0 %v1995, 120
        %v2015 = vpop.permute.xlu0 %2014
        %2016 = vrot.lane.b32.xlu0 %v1996, 120
        %v2017 = vpop.permute.xlu0 %2016
        %2018 = vrot.lane.b32.xlu0 %v1997, 120
        %v2019 = vpop.permute.xlu0 %2018
        %2020 = vrot.lane.b32.xlu0 %v1998, 120
        %v2021 = vpop.permute.xlu0 %2020
        %2022 = vrot.lane.b32.xlu0 %v1999, 120
        %v2023 = vpop.permute.xlu0 %2022
        %v2032 = vadd.f32 %v1982, %v2009
        %v2033 = vadd.f32 %v1983, %v2011
        %v2034 = vadd.f32 %v1984, %v2013
        %v2035 = vadd.f32 %v1985, %v2015
        %v2036 = vadd.f32 %v1986, %v2017
        %v2037 = vadd.f32 %v1987, %v2019
        %v2038 = vadd.f32 %v1988, %v2021
        %v2039 = vadd.f32 %v1989, %v2023
        %s2040 = sld [smem:[#allocation4 + $0x27]]
        %v2041 = vld [vmem:[#allocation2 + $0x4] sm:$0xff]
        %v2042 = vld [vmem:[#allocation2 + $0xc] sm:$0xff]
        %v2043 = vld [vmem:[#allocation2 + $0x14] sm:$0xff]
        %v2044 = vld [vmem:[#allocation2 + $0x1c] sm:$0xff]
        %v2045 = vld [vmem:[#allocation2 + $0x24] sm:$0xff]
        %v2046 = vld [vmem:[#allocation2 + $0x2c] sm:$0xff]
        %v2047 = vld [vmem:[#allocation2 + $0x34] sm:$0xff]
        %v2048 = vld [vmem:[#allocation2 + $0x3c] sm:$0xff]
        %v2049 = vstv %s2040
        %v2050 = vmul.f32 %v2049, %v2041
        %v2051 = vmul.f32 %v2049, %v2042
        %v2052 = vmul.f32 %v2049, %v2043
        %v2053 = vmul.f32 %v2049, %v2044
        %v2054 = vmul.f32 %v2049, %v2045
        %v2055 = vmul.f32 %v2049, %v2046
        %v2056 = vmul.f32 %v2049, %v2047
        %v2057 = vmul.f32 %v2049, %v2048
        %v2058 = vadd.f32 %v2032, %v2050
        %v2059 = vadd.f32 %v2033, %v2051
        %v2060 = vadd.f32 %v2034, %v2052
        %v2061 = vadd.f32 %v2035, %v2053
        %v2062 = vadd.f32 %v2036, %v2054
        %v2063 = vadd.f32 %v2037, %v2055
        %v2064 = vadd.f32 %v2038, %v2056
        %v2065 = vadd.f32 %v2039, %v2057
        %s2066 = sld [smem:[#allocation4 + $0x28]]
        %v2067 = vstv %s2066
        %v2068 = vmul.f32 %v2067, %v2041
        %v2069 = vmul.f32 %v2067, %v2042
        %v2070 = vmul.f32 %v2067, %v2043
        %v2071 = vmul.f32 %v2067, %v2044
        %v2072 = vmul.f32 %v2067, %v2045
        %v2073 = vmul.f32 %v2067, %v2046
        %v2074 = vmul.f32 %v2067, %v2047
        %v2075 = vmul.f32 %v2067, %v2048
        %2084 = vrot.lane.b32.xlu0 %v2068, 124
        %v2085 = vpop.permute.xlu0 %2084
        %2086 = vrot.lane.b32.xlu0 %v2069, 124
        %v2087 = vpop.permute.xlu0 %2086
        %2088 = vrot.lane.b32.xlu0 %v2070, 124
        %v2089 = vpop.permute.xlu0 %2088
        %2090 = vrot.lane.b32.xlu0 %v2071, 124
        %v2091 = vpop.permute.xlu0 %2090
        %2092 = vrot.lane.b32.xlu0 %v2072, 124
        %v2093 = vpop.permute.xlu0 %2092
        %2094 = vrot.lane.b32.xlu0 %v2073, 124
        %v2095 = vpop.permute.xlu0 %2094
        %2096 = vrot.lane.b32.xlu0 %v2074, 124
        %v2097 = vpop.permute.xlu0 %2096
        %2098 = vrot.lane.b32.xlu0 %v2075, 124
        %v2099 = vpop.permute.xlu0 %2098
        %v2108 = vadd.f32 %v2058, %v2085
        %v2109 = vadd.f32 %v2059, %v2087
        %v2110 = vadd.f32 %v2060, %v2089
        %v2111 = vadd.f32 %v2061, %v2091
        %v2112 = vadd.f32 %v2062, %v2093
        %v2113 = vadd.f32 %v2063, %v2095
        %v2114 = vadd.f32 %v2064, %v2097
        %v2115 = vadd.f32 %v2065, %v2099
        %s2116 = sld [smem:[#allocation4 + $0x29]]
        %v2117 = vstv %s2116
        %v2118 = vmul.f32 %v2117, %v2041
        %v2119 = vmul.f32 %v2117, %v2042
        %v2120 = vmul.f32 %v2117, %v2043
        %v2121 = vmul.f32 %v2117, %v2044
        %v2122 = vmul.f32 %v2117, %v2045
        %v2123 = vmul.f32 %v2117, %v2046
        %v2124 = vmul.f32 %v2117, %v2047
        %v2125 = vmul.f32 %v2117, %v2048
        %2134 = vrot.lane.b32.xlu0 %v2118, 120
        %v2135 = vpop.permute.xlu0 %2134
        %2136 = vrot.lane.b32.xlu0 %v2119, 120
        %v2137 = vpop.permute.xlu0 %2136
        %2138 = vrot.lane.b32.xlu0 %v2120, 120
        %v2139 = vpop.permute.xlu0 %2138
        %2140 = vrot.lane.b32.xlu0 %v2121, 120
        %v2141 = vpop.permute.xlu0 %2140
        %2142 = vrot.lane.b32.xlu0 %v2122, 120
        %v2143 = vpop.permute.xlu0 %2142
        %2144 = vrot.lane.b32.xlu0 %v2123, 120
        %v2145 = vpop.permute.xlu0 %2144
        %2146 = vrot.lane.b32.xlu0 %v2124, 120
        %v2147 = vpop.permute.xlu0 %2146
        %2148 = vrot.lane.b32.xlu0 %v2125, 120
        %v2149 = vpop.permute.xlu0 %2148
        %v2158 = vadd.f32 %v2108, %v2135
        %v2159 = vadd.f32 %v2109, %v2137
        %v2160 = vadd.f32 %v2110, %v2139
        %v2161 = vadd.f32 %v2111, %v2141
        %v2162 = vadd.f32 %v2112, %v2143
        %v2163 = vadd.f32 %v2113, %v2145
        %v2164 = vadd.f32 %v2114, %v2147
        %v2165 = vadd.f32 %v2115, %v2149
        %s2166 = sld [smem:[#allocation4 + $0x2a]]
        %v2167 = vld [vmem:[#allocation2 + $0x8] sm:$0xff]
        %v2168 = vld [vmem:[#allocation2 + $0x10] sm:$0xff]
        %v2169 = vld [vmem:[#allocation2 + $0x18] sm:$0xff]
        %v2170 = vld [vmem:[#allocation2 + $0x20] sm:$0xff]
        %v2171 = vld [vmem:[#allocation2 + $0x28] sm:$0xff]
        %v2172 = vld [vmem:[#allocation2 + $0x30] sm:$0xff]
        %v2173 = vld [vmem:[#allocation2 + $0x38] sm:$0xff]
        %v2174 = vld [vmem:[#allocation2 + $0x40] sm:$0xff]
        %v2175 = vstv %s2166
        %v2176 = vmul.f32 %v2175, %v2167
        %v2177 = vmul.f32 %v2175, %v2168
        %v2178 = vmul.f32 %v2175, %v2169
        %v2179 = vmul.f32 %v2175, %v2170
        %v2180 = vmul.f32 %v2175, %v2171
        %v2181 = vmul.f32 %v2175, %v2172
        %v2182 = vmul.f32 %v2175, %v2173
        %v2183 = vmul.f32 %v2175, %v2174
        %v2184 = vadd.f32 %v2158, %v2176
        %v2185 = vadd.f32 %v2159, %v2177
        %v2186 = vadd.f32 %v2160, %v2178
        %v2187 = vadd.f32 %v2161, %v2179
        %v2188 = vadd.f32 %v2162, %v2180
        %v2189 = vadd.f32 %v2163, %v2181
        %v2190 = vadd.f32 %v2164, %v2182
        %v2191 = vadd.f32 %v2165, %v2183
        %s2192 = sld [smem:[#allocation4 + $0x2b]]
        %v2193 = vstv %s2192
        %v2194 = vmul.f32 %v2193, %v2167
        %v2195 = vmul.f32 %v2193, %v2168
        %v2196 = vmul.f32 %v2193, %v2169
        %v2197 = vmul.f32 %v2193, %v2170
        %v2198 = vmul.f32 %v2193, %v2171
        %v2199 = vmul.f32 %v2193, %v2172
        %v2200 = vmul.f32 %v2193, %v2173
        %v2201 = vmul.f32 %v2193, %v2174
        %2210 = vrot.lane.b32.xlu0 %v2194, 124
        %v2211 = vpop.permute.xlu0 %2210
        %2212 = vrot.lane.b32.xlu0 %v2195, 124
        %v2213 = vpop.permute.xlu0 %2212
        %2214 = vrot.lane.b32.xlu0 %v2196, 124
        %v2215 = vpop.permute.xlu0 %2214
        %2216 = vrot.lane.b32.xlu0 %v2197, 124
        %v2217 = vpop.permute.xlu0 %2216
        %2218 = vrot.lane.b32.xlu0 %v2198, 124
        %v2219 = vpop.permute.xlu0 %2218
        %2220 = vrot.lane.b32.xlu0 %v2199, 124
        %v2221 = vpop.permute.xlu0 %2220
        %2222 = vrot.lane.b32.xlu0 %v2200, 124
        %v2223 = vpop.permute.xlu0 %2222
        %2224 = vrot.lane.b32.xlu0 %v2201, 124
        %v2225 = vpop.permute.xlu0 %2224
        %v2234 = vadd.f32 %v2184, %v2211
        %v2235 = vadd.f32 %v2185, %v2213
        %v2236 = vadd.f32 %v2186, %v2215
        %v2237 = vadd.f32 %v2187, %v2217
        %v2238 = vadd.f32 %v2188, %v2219
        %v2239 = vadd.f32 %v2189, %v2221
        %v2240 = vadd.f32 %v2190, %v2223
        %v2241 = vadd.f32 %v2191, %v2225
        %s2242 = sld [smem:[#allocation4 + $0x2c]]
        %v2243 = vstv %s2242
        %v2244 = vmul.f32 %v2243, %v2167
        %v2245 = vmul.f32 %v2243, %v2168
        %v2246 = vmul.f32 %v2243, %v2169
        %v2247 = vmul.f32 %v2243, %v2170
        %v2248 = vmul.f32 %v2243, %v2171
        %v2249 = vmul.f32 %v2243, %v2172
        %v2250 = vmul.f32 %v2243, %v2173
        %v2251 = vmul.f32 %v2243, %v2174
        %2260 = vrot.lane.b32.xlu0 %v2244, 120
        %v2261 = vpop.permute.xlu0 %2260
        %2262 = vrot.lane.b32.xlu0 %v2245, 120
        %v2263 = vpop.permute.xlu0 %2262
        %2264 = vrot.lane.b32.xlu0 %v2246, 120
        %v2265 = vpop.permute.xlu0 %2264
        %2266 = vrot.lane.b32.xlu0 %v2247, 120
        %v2267 = vpop.permute.xlu0 %2266
        %2268 = vrot.lane.b32.xlu0 %v2248, 120
        %v2269 = vpop.permute.xlu0 %2268
        %2270 = vrot.lane.b32.xlu0 %v2249, 120
        %v2271 = vpop.permute.xlu0 %2270
        %2272 = vrot.lane.b32.xlu0 %v2250, 120
        %v2273 = vpop.permute.xlu0 %2272
        %2274 = vrot.lane.b32.xlu0 %v2251, 120
        %v2275 = vpop.permute.xlu0 %2274
        %v2284 = vadd.f32 %v2234, %v2261
        %v2285 = vadd.f32 %v2235, %v2263
        %v2286 = vadd.f32 %v2236, %v2265
        %v2287 = vadd.f32 %v2237, %v2267
        %v2288 = vadd.f32 %v2238, %v2269
        %v2289 = vadd.f32 %v2239, %v2271
        %v2290 = vadd.f32 %v2240, %v2273
        %v2291 = vadd.f32 %v2241, %v2275
        %vm2292 = vcmask 523264
        %2293 = vst.msk [vmem:[%s173] sm:$0xff] %vm2292, %v2284
        %2294 = vst.msk [vmem:[%s173 + $0x8] sm:$0xff] %vm2292, %v2285
        %2295 = vst.msk [vmem:[%s173 + $0x10] sm:$0xff] %vm2292, %v2286
        %2296 = vst.msk [vmem:[%s173 + $0x18] sm:$0xff] %vm2292, %v2287
        %2297 = vst.msk [vmem:[%s173 + $0x20] sm:$0xff] %vm2292, %v2288
        %2298 = vst.msk [vmem:[%s173 + $0x28] sm:$0xff] %vm2292, %v2289
        %2299 = vst.msk [vmem:[%s173 + $0x30] sm:$0xff] %vm2292, %v2290
        %2300 = vst.msk [vmem:[%s173 + $0x38] sm:$0xff] %vm2292, %v2291
        %s2301 = sand.u32 %s75, 1
        %s2302 = scalar_lea.sflag [#allocation6], %s2301
        %s2303 = sand.u32 %s75, 1
        %s2304 = smul.addr %s2303, 64
        %s2305 = scalar_lea.vmem [#allocation9], %s2304
        // Predicated region
        $region37: #{tpu_custom_call.1} parent=27 // pred_check
          %p2306 = pneg %p85
        $region38: #{tpu_custom_call.1} parent=27 // pred_check_branch
          %2308 = sbr.rel (%p2306) target = $region40
        $region39: #{tpu_custom_call.1} parent=27 // pred_region
          %s2310 = ssub.s32 1024, 1024
          %2311 = vsyncadd %s2302, %s2310
          %s2312 = smul.addr %s20, 8
          %s2313 = smul.addr %s2312, 128
          %s2314 = scalar_lea.hbm %s2, %s2313
          %s2315 = sshll.u32 %s2305, 4
          %s2316 = int_to_ptr.vmem [resolvable:$true] %s2315
          %2321 = dma.vmem_to_hbm [thread:$0]  %s2316, 1024, %s2314, %s2302, 128, 128, 8
        $region40: #{tpu_custom_call.1} parent=27 // pred_fallthru
          _
      $region28: #{tpu_custom_call.1} parent=5 // pred_fallthru
        _
      %p2322 = scmp.le.s32.totalorder 2, %s15
      // Predicated region
      $region41: #{tpu_custom_call.1} parent=5 // pred_check
        %p2323 = pneg %p2322
      $region42: #{tpu_custom_call.1} parent=5 // pred_check_branch
        %2325 = sbr.rel (%p2323) target = $region44
      $region43: #{tpu_custom_call.1} parent=5 // pred_region
        %s2326 = ssub.s32 %s15, 2
        // Predicated region
        $region45: #{tpu_custom_call.1} parent=43 // pred_check
          %p2327 = pneg %p91
        $region46: #{tpu_custom_call.1} parent=43 // pred_check_branch
          %2329 = sbr.rel (%p2327) target = $region48
        $region47: #{tpu_custom_call.1} parent=43 // pred_region
          %s2330 = sand.u32 %s76, 1
          %s2331 = scalar_lea.sflag [#allocation6], %s2330
          %s2332 = sand.u32 %s76, 1
          %s2333 = smul.addr %s2332, 64
          %s2334 = scalar_lea.vmem [#allocation9], %s2333
          %2335 = dma.done %s2331, 1024
        $region48: #{tpu_custom_call.1} parent=43 // pred_fallthru
          _
      $region44: #{tpu_custom_call.1} parent=5 // pred_fallthru
        _
    $region6: #{tpu_custom_call.1} parent=1 // loop_footer
      %s19 = sadd.s32 1, %s15
    $region7: #{tpu_custom_call.1} parent=1 // loop_footer_branch
      %14 = sbr.rel target = $region3
    $region8: #{tpu_custom_call.1} parent=1 // loop_exit
      _
    %2336 = vsyncpa [#allocation5], 1
    %s2337 = scalar_lea.sflag [#allocation5], 1
    %2338 = vsyncpa %s2337, 1
    %2339 = vsyncpa [#allocation6], 1
    %s2340 = scalar_lea.sflag [#allocation6], 1
    %2341 = vsyncpa %s2340, 1
    %2342 = vsyncpa [#allocation7], 1
    %s2343 = scalar_lea.sflag [#allocation7], 1
    %2344 = vsyncpa %s2343, 1

</llo_original>
